<compile_context>
chip_gen: v5e
topology: v5e:2x2
jax: 0.10.0
libtpu: 0.0.40
codegen_flags: <defaults>
</compile_context>

<pallas_src>
import numpy as np
import jax
import jax.numpy as jnp
from jax import lax
from jax.experimental import pallas as pl
from jax.experimental.pallas import tpu as pltpu


def _make_lot_kernel(n_d, tH, WDp, D):
    """Kernel for one (batch n, H-tile h) grid point.

    Refs (in order):
      w_ref    : SMEM (1 + n_d, 27) f32   flattened 3x3x3 weights
      halo_ref : VMEM (2, WDp) f32        phase rows [h*tH - 1, h*tH + tH] (clamped)
      phi_ref  : VMEM (tH, WDp) f32       center phase rows
      mask_ref : VMEM (tH, WDp) f32       mask * scale, boundary voxels zeroed
      out_b_ref: VMEM (tH, WDp) f32                    (conv_x channel)
      out_d_ref: VMEM (n_d, tH, WDp) f32               (only if n_d > 0)
      g_ref    : VMEM scratch (27, tH, WDp) f32        (only if n_d > 0)
    """

    def lane_roll(x, delta):
        # out[..., p] = x[..., (p + delta) % WDp]; wrap-around only touches
        # W/D-boundary voxels, which mask_ref zeroes.
        if delta % WDp == 0:
            return x
        return pltpu.roll(x, shift=(-delta) % WDp, axis=1)

    def kernel(w_ref, halo_ref, phi_ref, mask_ref, *rest):
        if n_d:
            out_b_ref, out_d_ref, g_ref = rest
        else:
            (out_b_ref,) = rest

        phi_c = phi_ref[...]
        er_c = jnp.cos(phi_c)                   # expPhi_r (center rows)
        ei_c = jnp.sin(phi_c)                   # expPhi_i
        halo = halo_ref[...]
        er_h = jnp.cos(halo)                    # (2, WDp): z-halo rows
        ei_h = jnp.sin(halo)

        # z-shifted planes via the 1-row halo.
        er_m = jnp.concatenate([er_h[0:1], er_c[:tH - 1]], axis=0)   # z - 1
        ei_m = jnp.concatenate([ei_h[0:1], ei_c[:tH - 1]], axis=0)
        er_p = jnp.concatenate([er_c[1:], er_h[1:2]], axis=0)        # z + 1
        ei_p = jnp.concatenate([ei_c[1:], ei_h[1:2]], axis=0)
        planes = ((er_m, ei_m), (er_c, ei_c), (er_p, ei_p))

        m = mask_ref[...]

        # torch conv3d is cross-correlation:
        #   out[z,y,x] = sum_{dz,dy,dx} w[dz+1,dy+1,dx+1] * in[z+dz, y+dy, x+dx]
        # z-shift -> halo plane; (y,x)-shift -> one lane roll by dy*D+dx on the
        # fused (W, D) axis.  Each tap volume g is shared by all channels.
        acc_b = jnp.zeros((tH, WDp), jnp.float32)
        for iz in range(3):
            er_z, ei_z = planes[iz]
            for iy, dy in enumerate((-1, 0, 1)):
                for ix, dx in enumerate((-1, 0, 1)):
                    s = dy * D + dx
                    er_s = lane_roll(er_z, s)
                    ei_s = lane_roll(ei_z, s)
                    g = ei_s * er_c - er_s * ei_c
                    tap = iz * 9 + iy * 3 + ix
                    if n_d:
                        g_ref[tap] = g          # stash for the conv_y channels
                    acc_b = acc_b + w_ref[0, tap] * g
        out_b_ref[...] = (acc_b * m).astype(out_b_ref.dtype)

        if n_d:
            # One live accumulator at a time (no 16-wide accumulator spills);
            # tap volumes are re-read from the VMEM scratch.
            for o in range(n_d):
                acc = w_ref[1 + o, 0] * g_ref[0]
                for tap in range(1, 27):
                    acc = acc + w_ref[1 + o, tap] * g_ref[tap]
                out_d_ref[o] = (acc * m).astype(out_d_ref.dtype)

    return kernel


def _pick_tile_h(H, WDp, n_d, N, tile_h=None, budget_bytes=10 * 1024 * 1024):
    """Largest H-tile whose estimated per-step VMEM footprint fits the budget.

    Candidates are multiples of 8 dividing H (plus H itself, always a legal
    full-extent block).  When N == 1 we keep >= 2 H-tiles so both v7x
    TensorCores get work.
    """
    if tile_h is not None:
        tile_h = int(tile_h)
        assert H % tile_h == 0 and (tile_h % 8 == 0 or tile_h == H), \
            "tile_h must divide H and be a multiple of 8 (or equal H)"
        return tile_h
    cands = [d for d in range(H, 0, -1)
             if H % d == 0 and (d % 8 == 0 or d == H)]
    if N == 1 and len(cands) > 1:
        cands = [d for d in cands if d != H]

    def est_bytes(tH):
        n_out = 1 + n_d
        rows = (2 * tH                 # center phi (double-buffered)
                + 2 * 2                # halo rows (double-buffered)
                + 2 * tH               # mask
                + 2 * n_out * tH       # outputs (double-buffered)
                + (27 * tH if n_d else 0)   # tap scratch
                + 12 * tH)             # in-kernel temporaries headroom
        return 4 * WDp * rows

    for tH in cands:
        if est_bytes(tH) <= budget_bytes:
            return tH
    return cands[-1]


def lot_layer_forward(phi, mask, conv_x, TE, B0, conv_y=None, tile_h=None):
    """JAX/Pallas equivalent of LoTLayer.forward.

    phi, mask : (N, 1, H, W, D) float32
    conv_x    : (1, 1, 3, 3, 3) float32
    conv_y    : optional (n_d, 1, 3, 3, 3).  When None (the LoTLayer default,
                conv_y == conv_x repeated 15x), a deduplicated single-channel
                kernel runs and d_i is a broadcast of b_i.
    Returns (b_i, d_i): (N, 1, H, W, D) and (N, n_d, H, W, D).
    """
    N, C, H, W, D = phi.shape
    assert C == 1, "LoTLayer expects a single input channel"
    # Wrap-around rolls / clamped halos rely on boundary zeroing (as LG() does).
    assert H >= 3 and W >= 3 and D >= 3, "LoTLayer kernel needs H, W, D >= 3"

    WD = W * D
    WDp = ((WD + 127) // 128) * 128          # lane-dense (multiple of 128)
    pad = WDp - WD

    scale = float(3.0 * 0.02) / (float(B0) * float(TE))

    phi2 = phi.reshape(N, H, WD).astype(jnp.float32)
    mask2 = mask.reshape(N, H, WD).astype(jnp.float32)

    # LG() boundary zeroing + brain mask + scalar scale folded into one array.
    interior = jnp.zeros((H, W, D), jnp.float32).at[1:-1, 1:-1, 1:-1].set(1.0)
    mask_eff = mask2 * interior.reshape(1, H, WD) * jnp.float32(scale)
    if pad:
        phi2 = jnp.pad(phi2, ((0, 0), (0, 0), (0, pad)))
        mask_eff = jnp.pad(mask_eff, ((0, 0), (0, 0), (0, pad)))

    if conv_y is None:
        n_d = 0
        w_all = conv_x.reshape(1, 27).astype(jnp.float32)
    else:
        n_d = int(conv_y.shape[0])
        w_all = jnp.concatenate(
            [conv_x.reshape(1, 27), conv_y.reshape(n_d, 27)],
            axis=0).astype(jnp.float32)

    tH = _pick_tile_h(H, WDp, n_d, N, tile_h)
    num_t = H // tH

    # One halo row above / below each tile, clamped at the volume edge (the
    # clamped rows only influence boundary output rows, which mask_eff zeroes).
    tile0 = jnp.arange(num_t) * tH
    top_idx = jnp.maximum(tile0 - 1, 0)
    bot_idx = jnp.minimum(tile0 + tH, H - 1)
    halo = jnp.stack([phi2[:, top_idx, :], phi2[:, bot_idx, :]], axis=2)
    # halo: (N, num_t, 2, WDp)

    kernel = _make_lot_kernel(n_d, tH, WDp, D)

    in_specs = [
        pl.BlockSpec(memory_space=pltpu.MemorySpace.SMEM),                 # weights
        pl.BlockSpec((None, None, 2, WDp), lambda n, h: (n, h, 0, 0)),     # halo rows
        pl.BlockSpec((None, tH, WDp), lambda n, h: (n, h, 0)),             # phi tile
        pl.BlockSpec((None, tH, WDp), lambda n, h: (n, h, 0)),             # mask_eff
    ]
    cparams = pltpu.CompilerParams(
        dimension_semantics=("parallel", "parallel"),
        vmem_limit_bytes=32 * 1024 * 1024)

    if n_d == 0:
        out = pl.pallas_call(
            kernel,
            out_shape=jax.ShapeDtypeStruct((N, H, WDp), jnp.float32),
            grid=(N, num_t),
            in_specs=in_specs,
            out_specs=pl.BlockSpec((None, tH, WDp), lambda n, h: (n, h, 0)),
            compiler_params=cparams,
        )(w_all, halo, phi2, mask_eff)
        if pad:
            out = out[..., :WD]
        b_i = out.reshape(N, 1, H, W, D)
        # conv_y defaults to conv_x repeated 15x -> d_i is 15 copies of b_i.
        d_i = jnp.broadcast_to(b_i, (N, 15, H, W, D))
        return b_i, d_i

    out_b, out_d = pl.pallas_call(
        kernel,
        out_shape=(jax.ShapeDtypeStruct((N, 1, H, WDp), jnp.float32),
                   jax.ShapeDtypeStruct((N, n_d, H, WDp), jnp.float32)),
        grid=(N, num_t),
        in_specs=in_specs,
        out_specs=(
            pl.BlockSpec((None, None, tH, WDp), lambda n, h: (n, 0, h, 0)),
            pl.BlockSpec((None, n_d, tH, WDp), lambda n, h: (n, 0, h, 0)),
        ),
        scratch_shapes=[pltpu.VMEM((27, tH, WDp), jnp.float32)],
        compiler_params=cparams,
    )(w_all, halo, phi2, mask_eff)
    if pad:
        out_b = out_b[..., :WD]
        out_d = out_d[..., :WD]
    b_i = out_b.reshape(N, 1, H, W, D)
    d_i = out_d.reshape(N, n_d, H, W, D)
    return b_i, d_i


def _ref_forward(phi, mask, conv_x, TE, B0, conv_y=None):
    """Pure-JAX reference mirroring the PyTorch code (for validation)."""
    er = jnp.cos(phi)
    ei = jnp.sin(phi)
    if conv_y is None:
        conv_y = jnp.tile(conv_x, (15, 1, 1, 1, 1))

    def LG(x, w):
        out = lax.conv_general_dilated(
            x, w, window_strides=(1, 1, 1), padding=[(1, 1)] * 3,
            dimension_numbers=("NCDHW", "OIDHW", "NCDHW"),
            precision=lax.Precision.HIGHEST)
        H, W, D = out.shape[2:]
        out = out.at[:, :, 0].set(0.0).at[:, :, H - 1].set(0.0)
        out = out.at[:, :, :, 0].set(0.0).at[:, :, :, W - 1].set(0.0)
        out = out.at[:, :, :, :, 0].set(0.0).at[:, :, :, :, D - 1].set(0.0)
        return out

    def branch(w):
        a_r = LG(er, w)
        a_i = LG(ei, w)
        b = (a_i * er - a_r * ei) * mask
        return b / (B0 * TE) * (3 * 0.02)

    return branch(conv_x), branch(conv_y)


if __name__ == "__main__":
    key = jax.random.PRNGKey(0)
    N, H, W, D = 2, 16, 16, 16
    k1, k2, k3, k4 = jax.random.split(key, 4)

    phi = jax.random.uniform(k1, (N, 1, H, W, D), jnp.float32,
                             minval=-float(np.pi), maxval=float(np.pi))
    mask = (jax.random.uniform(k2, (N, 1, H, W, D)) > 0.2).astype(jnp.float32)
    # Asymmetric random weights so any shift-direction bug would be caught.
    conv_x = jax.random.normal(k3, (1, 1, 3, 3, 3), jnp.float32) * 0.5
    TE, B0 = 0.023, 3.0

    # Path 1: LoTLayer default (conv_y = conv_x repeated 15x) -> deduped
    # single-channel kernel; tile_h=8 exercises the haloed H-tiling path.
    b1, d1 = lot_layer_forward(phi, mask, conv_x, TE, B0, tile_h=8)
    jax.block_until_ready((b1, d1))
    rb1, rd1 = _ref_forward(phi, mask, conv_x, TE, B0)
    assert b1.shape == (N, 1, H, W, D) and d1.shape == (N, 15, H, W, D)
    assert jnp.allclose(b1, rb1, atol=1e-4, rtol=1e-4)
    assert jnp.allclose(d1, rd1, atol=1e-4, rtol=1e-4)

    # Path 2: distinct conv_y -> general multi-channel kernel (two pallas
    # outputs, shared 27-tap VMEM scratch), auto tile_h.
    conv_y = jax.random.normal(k4, (15, 1, 3, 3, 3), jnp.float32) * 0.5
    b2, d2 = lot_layer_forward(phi, mask, conv_x, TE, B0, conv_y=conv_y)
    jax.block_until_ready((b2, d2))
    rb2, rd2 = _ref_forward(phi, mask, conv_x, TE, B0, conv_y)
    assert b2.shape == (N, 1, H, W, D) and d2.shape == (N, 15, H, W, D)
    assert jnp.allclose(b2, rb2, atol=1e-4, rtol=1e-4)
    assert jnp.allclose(d2, rd2, atol=1e-4, rtol=1e-4)

    print("KERNEL_OK")
</pallas_src>

<mosaic_0001>
module attributes {stable_mosaic.version = 11 : i64} {
  func.func @kernel(%arg0: i32, %arg1: i32, %arg2: memref<1x27xf32, #tpu.memory_space<smem>>, %arg3: memref<1x1x2x256xf32, #tpu.memory_space<vmem>>, %arg4: memref<1x8x256xf32, #tpu.memory_space<vmem>>, %arg5: memref<1x8x256xf32, #tpu.memory_space<vmem>>, %arg6: memref<1x8x256xf32, #tpu.memory_space<vmem>>) attributes {dimension_semantics = [#tpu.dimension_semantics<parallel>, #tpu.dimension_semantics<parallel>], iteration_bounds = array<i64: 2, 2>, scalar_prefetch = 0 : i64, scratch_operands = 0 : i64, tpu.core_type = #tpu.core_type<tc>, window_params = [{transform_indices = @transform_0, window_bounds = array<i64: 1, 27>}, {transform_indices = @transform_1, window_bounds = array<i64: 1, 1, 2, 256>}, {transform_indices = @transform_2, window_bounds = array<i64: 1, 8, 256>}, {transform_indices = @transform_3, window_bounds = array<i64: 1, 8, 256>}, {transform_indices = @transform_4, window_bounds = array<i64: 1, 8, 256>}]} {
    %c0 = arith.constant 0 : index
    %c0_0 = arith.constant 0 : index
    %c0_1 = arith.constant 0 : index
    %0 = vector.load %arg4[%c0, %c0_0, %c0_1] : memref<1x8x256xf32, #tpu.memory_space<vmem>>, vector<1x8x256xf32>
    %1 = vector.shape_cast %0 : vector<1x8x256xf32> to vector<8x256xf32>
    %2 = math.cos %1 : vector<8x256xf32>
    %3 = math.sin %1 : vector<8x256xf32>
    %c0_2 = arith.constant 0 : index
    %c0_3 = arith.constant 0 : index
    %c0_4 = arith.constant 0 : index
    %c0_5 = arith.constant 0 : index
    %4 = vector.load %arg3[%c0_2, %c0_3, %c0_4, %c0_5] : memref<1x1x2x256xf32, #tpu.memory_space<vmem>>, vector<1x1x2x256xf32>
    %5 = vector.shape_cast %4 : vector<1x1x2x256xf32> to vector<2x256xf32>
    %6 = math.cos %5 : vector<2x256xf32>
    %7 = math.sin %5 : vector<2x256xf32>
    %8 = vector.extract_strided_slice %6 {offsets = [0, 0], sizes = [1, 256], strides = [1, 1]} : vector<2x256xf32> to vector<1x256xf32>
    %9 = vector.extract_strided_slice %2 {offsets = [0, 0], sizes = [7, 256], strides = [1, 1]} : vector<8x256xf32> to vector<7x256xf32>
    %10 = tpu.concatenate %8, %9 in 0 : vector<1x256xf32>, vector<7x256xf32> -> vector<8x256xf32>
    %11 = vector.extract_strided_slice %7 {offsets = [0, 0], sizes = [1, 256], strides = [1, 1]} : vector<2x256xf32> to vector<1x256xf32>
    %12 = vector.extract_strided_slice %3 {offsets = [0, 0], sizes = [7, 256], strides = [1, 1]} : vector<8x256xf32> to vector<7x256xf32>
    %13 = tpu.concatenate %11, %12 in 0 : vector<1x256xf32>, vector<7x256xf32> -> vector<8x256xf32>
    %14 = vector.extract_strided_slice %2 {offsets = [1, 0], sizes = [7, 256], strides = [1, 1]} : vector<8x256xf32> to vector<7x256xf32>
    %15 = vector.extract_strided_slice %6 {offsets = [1, 0], sizes = [1, 256], strides = [1, 1]} : vector<2x256xf32> to vector<1x256xf32>
    %16 = tpu.concatenate %14, %15 in 0 : vector<7x256xf32>, vector<1x256xf32> -> vector<8x256xf32>
    %17 = vector.extract_strided_slice %3 {offsets = [1, 0], sizes = [7, 256], strides = [1, 1]} : vector<8x256xf32> to vector<7x256xf32>
    %18 = vector.extract_strided_slice %7 {offsets = [1, 0], sizes = [1, 256], strides = [1, 1]} : vector<2x256xf32> to vector<1x256xf32>
    %19 = tpu.concatenate %17, %18 in 0 : vector<7x256xf32>, vector<1x256xf32> -> vector<8x256xf32>
    %c0_6 = arith.constant 0 : index
    %c0_7 = arith.constant 0 : index
    %c0_8 = arith.constant 0 : index
    %20 = vector.load %arg5[%c0_6, %c0_7, %c0_8] : memref<1x8x256xf32, #tpu.memory_space<vmem>>, vector<1x8x256xf32>
    %21 = vector.shape_cast %20 : vector<1x8x256xf32> to vector<8x256xf32>
    %cst = arith.constant 0.000000e+00 : f32
    %22 = vector.broadcast %cst : f32 to vector<8x256xf32>
    %c17_i32 = arith.constant 17 : i32
    %23 = tpu.dynamic_rotate %10 by %c17_i32 dim 1 : vector<8x256xf32>, i32 -> vector<8x256xf32>
    %c17_i32_9 = arith.constant 17 : i32
    %24 = tpu.dynamic_rotate %13 by %c17_i32_9 dim 1 : vector<8x256xf32>, i32 -> vector<8x256xf32>
    %25 = arith.mulf %24, %2 : vector<8x256xf32>
    %26 = arith.mulf %23, %3 : vector<8x256xf32>
    %27 = arith.subf %25, %26 : vector<8x256xf32>
    %c0_10 = arith.constant 0 : index
    %c0_11 = arith.constant 0 : index
    %28 = memref.load %arg2[%c0_10, %c0_11] : memref<1x27xf32, #tpu.memory_space<smem>>
    %29 = vector.broadcast %28 : f32 to vector<8x256xf32>
    %30 = arith.mulf %29, %27 : vector<8x256xf32>
    %31 = arith.addf %22, %30 : vector<8x256xf32>
    %c16_i32 = arith.constant 16 : i32
    %32 = tpu.dynamic_rotate %10 by %c16_i32 dim 1 : vector<8x256xf32>, i32 -> vector<8x256xf32>
    %c16_i32_12 = arith.constant 16 : i32
    %33 = tpu.dynamic_rotate %13 by %c16_i32_12 dim 1 : vector<8x256xf32>, i32 -> vector<8x256xf32>
    %34 = arith.mulf %33, %2 : vector<8x256xf32>
    %35 = arith.mulf %32, %3 : vector<8x256xf32>
    %36 = arith.subf %34, %35 : vector<8x256xf32>
    %c0_13 = arith.constant 0 : index
    %c1 = arith.constant 1 : index
    %37 = memref.load %arg2[%c0_13, %c1] : memref<1x27xf32, #tpu.memory_space<smem>>
    %38 = vector.broadcast %37 : f32 to vector<8x256xf32>
    %39 = arith.mulf %38, %36 : vector<8x256xf32>
    %40 = arith.addf %31, %39 : vector<8x256xf32>
    %c15_i32 = arith.constant 15 : i32
    %41 = tpu.dynamic_rotate %10 by %c15_i32 dim 1 : vector<8x256xf32>, i32 -> vector<8x256xf32>
    %c15_i32_14 = arith.constant 15 : i32
    %42 = tpu.dynamic_rotate %13 by %c15_i32_14 dim 1 : vector<8x256xf32>, i32 -> vector<8x256xf32>
    %43 = arith.mulf %42, %2 : vector<8x256xf32>
    %44 = arith.mulf %41, %3 : vector<8x256xf32>
    %45 = arith.subf %43, %44 : vector<8x256xf32>
    %c0_15 = arith.constant 0 : index
    %c2 = arith.constant 2 : index
    %46 = memref.load %arg2[%c0_15, %c2] : memref<1x27xf32, #tpu.memory_space<smem>>
    %47 = vector.broadcast %46 : f32 to vector<8x256xf32>
    %48 = arith.mulf %47, %45 : vector<8x256xf32>
    %49 = arith.addf %40, %48 : vector<8x256xf32>
    %c1_i32 = arith.constant 1 : i32
    %50 = tpu.dynamic_rotate %10 by %c1_i32 dim 1 : vector<8x256xf32>, i32 -> vector<8x256xf32>
    %c1_i32_16 = arith.constant 1 : i32
    %51 = tpu.dynamic_rotate %13 by %c1_i32_16 dim 1 : vector<8x256xf32>, i32 -> vector<8x256xf32>
    %52 = arith.mulf %51, %2 : vector<8x256xf32>
    %53 = arith.mulf %50, %3 : vector<8x256xf32>
    %54 = arith.subf %52, %53 : vector<8x256xf32>
    %c0_17 = arith.constant 0 : index
    %c3 = arith.constant 3 : index
    %55 = memref.load %arg2[%c0_17, %c3] : memref<1x27xf32, #tpu.memory_space<smem>>
    %56 = vector.broadcast %55 : f32 to vector<8x256xf32>
    %57 = arith.mulf %56, %54 : vector<8x256xf32>
    %58 = arith.addf %49, %57 : vector<8x256xf32>
    %59 = arith.mulf %13, %2 : vector<8x256xf32>
    %60 = arith.mulf %10, %3 : vector<8x256xf32>
    %61 = arith.subf %59, %60 : vector<8x256xf32>
    %c0_18 = arith.constant 0 : index
    %c4 = arith.constant 4 : index
    %62 = memref.load %arg2[%c0_18, %c4] : memref<1x27xf32, #tpu.memory_space<smem>>
    %63 = vector.broadcast %62 : f32 to vector<8x256xf32>
    %64 = arith.mulf %63, %61 : vector<8x256xf32>
    %65 = arith.addf %58, %64 : vector<8x256xf32>
    %c255_i32 = arith.constant 255 : i32
    %66 = tpu.dynamic_rotate %10 by %c255_i32 dim 1 : vector<8x256xf32>, i32 -> vector<8x256xf32>
    %c255_i32_19 = arith.constant 255 : i32
    %67 = tpu.dynamic_rotate %13 by %c255_i32_19 dim 1 : vector<8x256xf32>, i32 -> vector<8x256xf32>
    %68 = arith.mulf %67, %2 : vector<8x256xf32>
    %69 = arith.mulf %66, %3 : vector<8x256xf32>
    %70 = arith.subf %68, %69 : vector<8x256xf32>
    %c0_20 = arith.constant 0 : index
    %c5 = arith.constant 5 : index
    %71 = memref.load %arg2[%c0_20, %c5] : memref<1x27xf32, #tpu.memory_space<smem>>
    %72 = vector.broadcast %71 : f32 to vector<8x256xf32>
    %73 = arith.mulf %72, %70 : vector<8x256xf32>
    %74 = arith.addf %65, %73 : vector<8x256xf32>
    %c241_i32 = arith.constant 241 : i32
    %75 = tpu.dynamic_rotate %10 by %c241_i32 dim 1 : vector<8x256xf32>, i32 -> vector<8x256xf32>
    %c241_i32_21 = arith.constant 241 : i32
    %76 = tpu.dynamic_rotate %13 by %c241_i32_21 dim 1 : vector<8x256xf32>, i32 -> vector<8x256xf32>
    %77 = arith.mulf %76, %2 : vector<8x256xf32>
    %78 = arith.mulf %75, %3 : vector<8x256xf32>
    %79 = arith.subf %77, %78 : vector<8x256xf32>
    %c0_22 = arith.constant 0 : index
    %c6 = arith.constant 6 : index
    %80 = memref.load %arg2[%c0_22, %c6] : memref<1x27xf32, #tpu.memory_space<smem>>
    %81 = vector.broadcast %80 : f32 to vector<8x256xf32>
    %82 = arith.mulf %81, %79 : vector<8x256xf32>
    %83 = arith.addf %74, %82 : vector<8x256xf32>
    %c240_i32 = arith.constant 240 : i32
    %84 = tpu.dynamic_rotate %10 by %c240_i32 dim 1 : vector<8x256xf32>, i32 -> vector<8x256xf32>
    %c240_i32_23 = arith.constant 240 : i32
    %85 = tpu.dynamic_rotate %13 by %c240_i32_23 dim 1 : vector<8x256xf32>, i32 -> vector<8x256xf32>
    %86 = arith.mulf %85, %2 : vector<8x256xf32>
    %87 = arith.mulf %84, %3 : vector<8x256xf32>
    %88 = arith.subf %86, %87 : vector<8x256xf32>
    %c0_24 = arith.constant 0 : index
    %c7 = arith.constant 7 : index
    %89 = memref.load %arg2[%c0_24, %c7] : memref<1x27xf32, #tpu.memory_space<smem>>
    %90 = vector.broadcast %89 : f32 to vector<8x256xf32>
    %91 = arith.mulf %90, %88 : vector<8x256xf32>
    %92 = arith.addf %83, %91 : vector<8x256xf32>
    %c239_i32 = arith.constant 239 : i32
    %93 = tpu.dynamic_rotate %10 by %c239_i32 dim 1 : vector<8x256xf32>, i32 -> vector<8x256xf32>
    %c239_i32_25 = arith.constant 239 : i32
    %94 = tpu.dynamic_rotate %13 by %c239_i32_25 dim 1 : vector<8x256xf32>, i32 -> vector<8x256xf32>
    %95 = arith.mulf %94, %2 : vector<8x256xf32>
    %96 = arith.mulf %93, %3 : vector<8x256xf32>
    %97 = arith.subf %95, %96 : vector<8x256xf32>
    %c0_26 = arith.constant 0 : index
    %c8 = arith.constant 8 : index
    %98 = memref.load %arg2[%c0_26, %c8] : memref<1x27xf32, #tpu.memory_space<smem>>
    %99 = vector.broadcast %98 : f32 to vector<8x256xf32>
    %100 = arith.mulf %99, %97 : vector<8x256xf32>
    %101 = arith.addf %92, %100 : vector<8x256xf32>
    %c17_i32_27 = arith.constant 17 : i32
    %102 = tpu.dynamic_rotate %2 by %c17_i32_27 dim 1 : vector<8x256xf32>, i32 -> vector<8x256xf32>
    %c17_i32_28 = arith.constant 17 : i32
    %103 = tpu.dynamic_rotate %3 by %c17_i32_28 dim 1 : vector<8x256xf32>, i32 -> vector<8x256xf32>
    %104 = arith.mulf %103, %2 : vector<8x256xf32>
    %105 = arith.mulf %102, %3 : vector<8x256xf32>
    %106 = arith.subf %104, %105 : vector<8x256xf32>
    %c0_29 = arith.constant 0 : index
    %c9 = arith.constant 9 : index
    %107 = memref.load %arg2[%c0_29, %c9] : memref<1x27xf32, #tpu.memory_space<smem>>
    %108 = vector.broadcast %107 : f32 to vector<8x256xf32>
    %109 = arith.mulf %108, %106 : vector<8x256xf32>
    %110 = arith.addf %101, %109 : vector<8x256xf32>
    %c16_i32_30 = arith.constant 16 : i32
    %111 = tpu.dynamic_rotate %2 by %c16_i32_30 dim 1 : vector<8x256xf32>, i32 -> vector<8x256xf32>
    %c16_i32_31 = arith.constant 16 : i32
    %112 = tpu.dynamic_rotate %3 by %c16_i32_31 dim 1 : vector<8x256xf32>, i32 -> vector<8x256xf32>
    %113 = arith.mulf %112, %2 : vector<8x256xf32>
    %114 = arith.mulf %111, %3 : vector<8x256xf32>
    %115 = arith.subf %113, %114 : vector<8x256xf32>
    %c0_32 = arith.constant 0 : index
    %c10 = arith.constant 10 : index
    %116 = memref.load %arg2[%c0_32, %c10] : memref<1x27xf32, #tpu.memory_space<smem>>
    %117 = vector.broadcast %116 : f32 to vector<8x256xf32>
    %118 = arith.mulf %117, %115 : vector<8x256xf32>
    %119 = arith.addf %110, %118 : vector<8x256xf32>
    %c15_i32_33 = arith.constant 15 : i32
    %120 = tpu.dynamic_rotate %2 by %c15_i32_33 dim 1 : vector<8x256xf32>, i32 -> vector<8x256xf32>
    %c15_i32_34 = arith.constant 15 : i32
    %121 = tpu.dynamic_rotate %3 by %c15_i32_34 dim 1 : vector<8x256xf32>, i32 -> vector<8x256xf32>
    %122 = arith.mulf %121, %2 : vector<8x256xf32>
    %123 = arith.mulf %120, %3 : vector<8x256xf32>
    %124 = arith.subf %122, %123 : vector<8x256xf32>
    %c0_35 = arith.constant 0 : index
    %c11 = arith.constant 11 : index
    %125 = memref.load %arg2[%c0_35, %c11] : memref<1x27xf32, #tpu.memory_space<smem>>
    %126 = vector.broadcast %125 : f32 to vector<8x256xf32>
    %127 = arith.mulf %126, %124 : vector<8x256xf32>
    %128 = arith.addf %119, %127 : vector<8x256xf32>
    %c1_i32_36 = arith.constant 1 : i32
    %129 = tpu.dynamic_rotate %2 by %c1_i32_36 dim 1 : vector<8x256xf32>, i32 -> vector<8x256xf32>
    %c1_i32_37 = arith.constant 1 : i32
    %130 = tpu.dynamic_rotate %3 by %c1_i32_37 dim 1 : vector<8x256xf32>, i32 -> vector<8x256xf32>
    %131 = arith.mulf %130, %2 : vector<8x256xf32>
    %132 = arith.mulf %129, %3 : vector<8x256xf32>
    %133 = arith.subf %131, %132 : vector<8x256xf32>
    %c0_38 = arith.constant 0 : index
    %c12 = arith.constant 12 : index
    %134 = memref.load %arg2[%c0_38, %c12] : memref<1x27xf32, #tpu.memory_space<smem>>
    %135 = vector.broadcast %134 : f32 to vector<8x256xf32>
    %136 = arith.mulf %135, %133 : vector<8x256xf32>
    %137 = arith.addf %128, %136 : vector<8x256xf32>
    %138 = arith.mulf %3, %2 : vector<8x256xf32>
    %139 = arith.mulf %2, %3 : vector<8x256xf32>
    %140 = arith.subf %138, %139 : vector<8x256xf32>
    %c0_39 = arith.constant 0 : index
    %c13 = arith.constant 13 : index
    %141 = memref.load %arg2[%c0_39, %c13] : memref<1x27xf32, #tpu.memory_space<smem>>
    %142 = vector.broadcast %141 : f32 to vector<8x256xf32>
    %143 = arith.mulf %142, %140 : vector<8x256xf32>
    %144 = arith.addf %137, %143 : vector<8x256xf32>
    %c255_i32_40 = arith.constant 255 : i32
    %145 = tpu.dynamic_rotate %2 by %c255_i32_40 dim 1 : vector<8x256xf32>, i32 -> vector<8x256xf32>
    %c255_i32_41 = arith.constant 255 : i32
    %146 = tpu.dynamic_rotate %3 by %c255_i32_41 dim 1 : vector<8x256xf32>, i32 -> vector<8x256xf32>
    %147 = arith.mulf %146, %2 : vector<8x256xf32>
    %148 = arith.mulf %145, %3 : vector<8x256xf32>
    %149 = arith.subf %147, %148 : vector<8x256xf32>
    %c0_42 = arith.constant 0 : index
    %c14 = arith.constant 14 : index
    %150 = memref.load %arg2[%c0_42, %c14] : memref<1x27xf32, #tpu.memory_space<smem>>
    %151 = vector.broadcast %150 : f32 to vector<8x256xf32>
    %152 = arith.mulf %151, %149 : vector<8x256xf32>
    %153 = arith.addf %144, %152 : vector<8x256xf32>
    %c241_i32_43 = arith.constant 241 : i32
    %154 = tpu.dynamic_rotate %2 by %c241_i32_43 dim 1 : vector<8x256xf32>, i32 -> vector<8x256xf32>
    %c241_i32_44 = arith.constant 241 : i32
    %155 = tpu.dynamic_rotate %3 by %c241_i32_44 dim 1 : vector<8x256xf32>, i32 -> vector<8x256xf32>
    %156 = arith.mulf %155, %2 : vector<8x256xf32>
    %157 = arith.mulf %154, %3 : vector<8x256xf32>
    %158 = arith.subf %156, %157 : vector<8x256xf32>
    %c0_45 = arith.constant 0 : index
    %c15 = arith.constant 15 : index
    %159 = memref.load %arg2[%c0_45, %c15] : memref<1x27xf32, #tpu.memory_space<smem>>
    %160 = vector.broadcast %159 : f32 to vector<8x256xf32>
    %161 = arith.mulf %160, %158 : vector<8x256xf32>
    %162 = arith.addf %153, %161 : vector<8x256xf32>
    %c240_i32_46 = arith.constant 240 : i32
    %163 = tpu.dynamic_rotate %2 by %c240_i32_46 dim 1 : vector<8x256xf32>, i32 -> vector<8x256xf32>
    %c240_i32_47 = arith.constant 240 : i32
    %164 = tpu.dynamic_rotate %3 by %c240_i32_47 dim 1 : vector<8x256xf32>, i32 -> vector<8x256xf32>
    %165 = arith.mulf %164, %2 : vector<8x256xf32>
    %166 = arith.mulf %163, %3 : vector<8x256xf32>
    %167 = arith.subf %165, %166 : vector<8x256xf32>
    %c0_48 = arith.constant 0 : index
    %c16 = arith.constant 16 : index
    %168 = memref.load %arg2[%c0_48, %c16] : memref<1x27xf32, #tpu.memory_space<smem>>
    %169 = vector.broadcast %168 : f32 to vector<8x256xf32>
    %170 = arith.mulf %169, %167 : vector<8x256xf32>
    %171 = arith.addf %162, %170 : vector<8x256xf32>
    %c239_i32_49 = arith.constant 239 : i32
    %172 = tpu.dynamic_rotate %2 by %c239_i32_49 dim 1 : vector<8x256xf32>, i32 -> vector<8x256xf32>
    %c239_i32_50 = arith.constant 239 : i32
    %173 = tpu.dynamic_rotate %3 by %c239_i32_50 dim 1 : vector<8x256xf32>, i32 -> vector<8x256xf32>
    %174 = arith.mulf %173, %2 : vector<8x256xf32>
    %175 = arith.mulf %172, %3 : vector<8x256xf32>
    %176 = arith.subf %174, %175 : vector<8x256xf32>
    %c0_51 = arith.constant 0 : index
    %c17 = arith.constant 17 : index
    %177 = memref.load %arg2[%c0_51, %c17] : memref<1x27xf32, #tpu.memory_space<smem>>
    %178 = vector.broadcast %177 : f32 to vector<8x256xf32>
    %179 = arith.mulf %178, %176 : vector<8x256xf32>
    %180 = arith.addf %171, %179 : vector<8x256xf32>
    %c17_i32_52 = arith.constant 17 : i32
    %181 = tpu.dynamic_rotate %16 by %c17_i32_52 dim 1 : vector<8x256xf32>, i32 -> vector<8x256xf32>
    %c17_i32_53 = arith.constant 17 : i32
    %182 = tpu.dynamic_rotate %19 by %c17_i32_53 dim 1 : vector<8x256xf32>, i32 -> vector<8x256xf32>
    %183 = arith.mulf %182, %2 : vector<8x256xf32>
    %184 = arith.mulf %181, %3 : vector<8x256xf32>
    %185 = arith.subf %183, %184 : vector<8x256xf32>
    %c0_54 = arith.constant 0 : index
    %c18 = arith.constant 18 : index
    %186 = memref.load %arg2[%c0_54, %c18] : memref<1x27xf32, #tpu.memory_space<smem>>
    %187 = vector.broadcast %186 : f32 to vector<8x256xf32>
    %188 = arith.mulf %187, %185 : vector<8x256xf32>
    %189 = arith.addf %180, %188 : vector<8x256xf32>
    %c16_i32_55 = arith.constant 16 : i32
    %190 = tpu.dynamic_rotate %16 by %c16_i32_55 dim 1 : vector<8x256xf32>, i32 -> vector<8x256xf32>
    %c16_i32_56 = arith.constant 16 : i32
    %191 = tpu.dynamic_rotate %19 by %c16_i32_56 dim 1 : vector<8x256xf32>, i32 -> vector<8x256xf32>
    %192 = arith.mulf %191, %2 : vector<8x256xf32>
    %193 = arith.mulf %190, %3 : vector<8x256xf32>
    %194 = arith.subf %192, %193 : vector<8x256xf32>
    %c0_57 = arith.constant 0 : index
    %c19 = arith.constant 19 : index
    %195 = memref.load %arg2[%c0_57, %c19] : memref<1x27xf32, #tpu.memory_space<smem>>
    %196 = vector.broadcast %195 : f32 to vector<8x256xf32>
    %197 = arith.mulf %196, %194 : vector<8x256xf32>
    %198 = arith.addf %189, %197 : vector<8x256xf32>
    %c15_i32_58 = arith.constant 15 : i32
    %199 = tpu.dynamic_rotate %16 by %c15_i32_58 dim 1 : vector<8x256xf32>, i32 -> vector<8x256xf32>
    %c15_i32_59 = arith.constant 15 : i32
    %200 = tpu.dynamic_rotate %19 by %c15_i32_59 dim 1 : vector<8x256xf32>, i32 -> vector<8x256xf32>
    %201 = arith.mulf %200, %2 : vector<8x256xf32>
    %202 = arith.mulf %199, %3 : vector<8x256xf32>
    %203 = arith.subf %201, %202 : vector<8x256xf32>
    %c0_60 = arith.constant 0 : index
    %c20 = arith.constant 20 : index
    %204 = memref.load %arg2[%c0_60, %c20] : memref<1x27xf32, #tpu.memory_space<smem>>
    %205 = vector.broadcast %204 : f32 to vector<8x256xf32>
    %206 = arith.mulf %205, %203 : vector<8x256xf32>
    %207 = arith.addf %198, %206 : vector<8x256xf32>
    %c1_i32_61 = arith.constant 1 : i32
    %208 = tpu.dynamic_rotate %16 by %c1_i32_61 dim 1 : vector<8x256xf32>, i32 -> vector<8x256xf32>
    %c1_i32_62 = arith.constant 1 : i32
    %209 = tpu.dynamic_rotate %19 by %c1_i32_62 dim 1 : vector<8x256xf32>, i32 -> vector<8x256xf32>
    %210 = arith.mulf %209, %2 : vector<8x256xf32>
    %211 = arith.mulf %208, %3 : vector<8x256xf32>
    %212 = arith.subf %210, %211 : vector<8x256xf32>
    %c0_63 = arith.constant 0 : index
    %c21 = arith.constant 21 : index
    %213 = memref.load %arg2[%c0_63, %c21] : memref<1x27xf32, #tpu.memory_space<smem>>
    %214 = vector.broadcast %213 : f32 to vector<8x256xf32>
    %215 = arith.mulf %214, %212 : vector<8x256xf32>
    %216 = arith.addf %207, %215 : vector<8x256xf32>
    %217 = arith.mulf %19, %2 : vector<8x256xf32>
    %218 = arith.mulf %16, %3 : vector<8x256xf32>
    %219 = arith.subf %217, %218 : vector<8x256xf32>
    %c0_64 = arith.constant 0 : index
    %c22 = arith.constant 22 : index
    %220 = memref.load %arg2[%c0_64, %c22] : memref<1x27xf32, #tpu.memory_space<smem>>
    %221 = vector.broadcast %220 : f32 to vector<8x256xf32>
    %222 = arith.mulf %221, %219 : vector<8x256xf32>
    %223 = arith.addf %216, %222 : vector<8x256xf32>
    %c255_i32_65 = arith.constant 255 : i32
    %224 = tpu.dynamic_rotate %16 by %c255_i32_65 dim 1 : vector<8x256xf32>, i32 -> vector<8x256xf32>
    %c255_i32_66 = arith.constant 255 : i32
    %225 = tpu.dynamic_rotate %19 by %c255_i32_66 dim 1 : vector<8x256xf32>, i32 -> vector<8x256xf32>
    %226 = arith.mulf %225, %2 : vector<8x256xf32>
    %227 = arith.mulf %224, %3 : vector<8x256xf32>
    %228 = arith.subf %226, %227 : vector<8x256xf32>
    %c0_67 = arith.constant 0 : index
    %c23 = arith.constant 23 : index
    %229 = memref.load %arg2[%c0_67, %c23] : memref<1x27xf32, #tpu.memory_space<smem>>
    %230 = vector.broadcast %229 : f32 to vector<8x256xf32>
    %231 = arith.mulf %230, %228 : vector<8x256xf32>
    %232 = arith.addf %223, %231 : vector<8x256xf32>
    %c241_i32_68 = arith.constant 241 : i32
    %233 = tpu.dynamic_rotate %16 by %c241_i32_68 dim 1 : vector<8x256xf32>, i32 -> vector<8x256xf32>
    %c241_i32_69 = arith.constant 241 : i32
    %234 = tpu.dynamic_rotate %19 by %c241_i32_69 dim 1 : vector<8x256xf32>, i32 -> vector<8x256xf32>
    %235 = arith.mulf %234, %2 : vector<8x256xf32>
    %236 = arith.mulf %233, %3 : vector<8x256xf32>
    %237 = arith.subf %235, %236 : vector<8x256xf32>
    %c0_70 = arith.constant 0 : index
    %c24 = arith.constant 24 : index
    %238 = memref.load %arg2[%c0_70, %c24] : memref<1x27xf32, #tpu.memory_space<smem>>
    %239 = vector.broadcast %238 : f32 to vector<8x256xf32>
    %240 = arith.mulf %239, %237 : vector<8x256xf32>
    %241 = arith.addf %232, %240 : vector<8x256xf32>
    %c240_i32_71 = arith.constant 240 : i32
    %242 = tpu.dynamic_rotate %16 by %c240_i32_71 dim 1 : vector<8x256xf32>, i32 -> vector<8x256xf32>
    %c240_i32_72 = arith.constant 240 : i32
    %243 = tpu.dynamic_rotate %19 by %c240_i32_72 dim 1 : vector<8x256xf32>, i32 -> vector<8x256xf32>
    %244 = arith.mulf %243, %2 : vector<8x256xf32>
    %245 = arith.mulf %242, %3 : vector<8x256xf32>
    %246 = arith.subf %244, %245 : vector<8x256xf32>
    %c0_73 = arith.constant 0 : index
    %c25 = arith.constant 25 : index
    %247 = memref.load %arg2[%c0_73, %c25] : memref<1x27xf32, #tpu.memory_space<smem>>
    %248 = vector.broadcast %247 : f32 to vector<8x256xf32>
    %249 = arith.mulf %248, %246 : vector<8x256xf32>
    %250 = arith.addf %241, %249 : vector<8x256xf32>
    %c239_i32_74 = arith.constant 239 : i32
    %251 = tpu.dynamic_rotate %16 by %c239_i32_74 dim 1 : vector<8x256xf32>, i32 -> vector<8x256xf32>
    %c239_i32_75 = arith.constant 239 : i32
    %252 = tpu.dynamic_rotate %19 by %c239_i32_75 dim 1 : vector<8x256xf32>, i32 -> vector<8x256xf32>
    %253 = arith.mulf %252, %2 : vector<8x256xf32>
    %254 = arith.mulf %251, %3 : vector<8x256xf32>
    %255 = arith.subf %253, %254 : vector<8x256xf32>
    %c0_76 = arith.constant 0 : index
    %c26 = arith.constant 26 : index
    %256 = memref.load %arg2[%c0_76, %c26] : memref<1x27xf32, #tpu.memory_space<smem>>
    %257 = vector.broadcast %256 : f32 to vector<8x256xf32>
    %258 = arith.mulf %257, %255 : vector<8x256xf32>
    %259 = arith.addf %250, %258 : vector<8x256xf32>
    %260 = arith.mulf %259, %21 : vector<8x256xf32>
    %c0_77 = arith.constant 0 : index
    %c0_78 = arith.constant 0 : index
    %c0_79 = arith.constant 0 : index
    %261 = vector.load %arg6[%c0_77, %c0_78, %c0_79] : memref<1x8x256xf32, #tpu.memory_space<vmem>>, vector<1x8x256xf32>
    %262 = vector.shape_cast %261 : vector<1x8x256xf32> to vector<8x256xf32>
    %263 = vector.shape_cast %260 : vector<8x256xf32> to vector<1x8x256xf32>
    tpu.vector_store %arg6[%c0_77, %c0_78, %c0_79], %263 {strides = array<i32>} : memref<1x8x256xf32, #tpu.memory_space<vmem>>, vector<1x8x256xf32>,
    return
  }
  func.func @transform_0(%arg0: i32, %arg1: i32) -> (i32, i32) {
    %c0_i32 = arith.constant 0 : i32
    %c0_i32_0 = arith.constant 0 : i32
    %c0_i32_1 = arith.constant 0 : i32
    return %c0_i32, %c0_i32_0 : i32, i32
  }
  func.func @transform_1(%arg0: i32, %arg1: i32) -> (i32, i32, i32, i32) {
    %c0_i32 = arith.constant 0 : i32
    %c0_i32_0 = arith.constant 0 : i32
    %c0_i32_1 = arith.constant 0 : i32
    return %arg0, %arg1, %c0_i32, %c0_i32_0 : i32, i32, i32, i32
  }
  func.func @transform_2(%arg0: i32, %arg1: i32) -> (i32, i32, i32) {
    %c0_i32 = arith.constant 0 : i32
    %c0_i32_0 = arith.constant 0 : i32
    return %arg0, %arg1, %c0_i32 : i32, i32, i32
  }
  func.func @transform_3(%arg0: i32, %arg1: i32) -> (i32, i32, i32) {
    %c0_i32 = arith.constant 0 : i32
    %c0_i32_0 = arith.constant 0 : i32
    return %arg0, %arg1, %c0_i32 : i32, i32, i32
  }
  func.func @transform_4(%arg0: i32, %arg1: i32) -> (i32, i32, i32) {
    %c0_i32 = arith.constant 0 : i32
    %c0_i32_0 = arith.constant 0 : i32
    return %arg0, %arg1, %c0_i32 : i32, i32, i32
  }
}

</mosaic_0001>

<llo_original>
// kernel: tpu_custom_call.1
$region0: #{tpu_custom_call.1}
  #allocation0 [shape = 'u32[]', space=smem, size = 0x4, offset = 0x4, fixed_abs, tag = 'smem constant byte address 0x4 - core index']
  #allocation1 [shape = 'u32[72,128]{1,0:T(1,128)}', space=vmem, size = 0x9000, scoped, tag = 'internal scratch']
  %s0 = inlined_call_operand.hbm [shape: f32[1,27], index: 0, kind: input, shape index: {}]
  %s1 = inlined_call_operand.hbm [shape: f32[2,2,2,256], index: 1, kind: input, shape index: {}]
  %s2 = inlined_call_operand.hbm [shape: f32[2,16,256], index: 2, kind: input, shape index: {}]
  %s3 = inlined_call_operand.hbm [shape: f32[2,16,256], index: 3, kind: input, shape index: {}]
  %s4 = inlined_call_operand.hbm [shape: f32[2,16,256], index: 4, kind: output, shape index: {}]
  %s5 = sld [smem:[#allocation0]]
  $region65: #{tpu_custom_call.1} parent=0
    _
  %s7 = ssub.s32 1, %s5
  %s8 = scalar_select 0, %s7, %s5
  $region1: #{tpu_custom_call.1} parent=0
    #allocation2 [shape = 'u8[512]{0}', space=smem, size = 0x200, scoped, tag = 'input window, operand 0, single buffered']
    #allocation3 [shape = 's32[2]{0}', space=sflag, size = 0x8, scoped, tag = 'scoped memory for tpu_custom_call.1']
    #allocation4 [shape = 's32[2]{0}', space=sflag, size = 0x8, scoped, tag = 'scoped memory for tpu_custom_call.1']
    #allocation5 [shape = 's32[2]{0}', space=sflag, size = 0x8, scoped, tag = 'scoped memory for tpu_custom_call.1']
    #allocation6 [shape = 'u8[4096]{0}', space=vmem, size = 0x1000, scoped, tag = 'input window, operand 1']
    #allocation7 [shape = 'u8[16384]{0}', space=vmem, size = 0x4000, scoped, tag = 'input window, operand 2']
    #allocation8 [shape = 's32[2]{0}', space=sflag, size = 0x8, scoped, tag = 'scoped memory for tpu_custom_call.1']
    #allocation9 [shape = 'u8[16384]{0}', space=vmem, size = 0x4000, scoped, tag = 'input window, operand 3']
    #allocation10 [shape = 'u8[16384]{0}', space=vmem, size = 0x4000, scoped, tag = 'output window, operand 0']
    %9 = vsyncpa [#allocation5], 0
    %10 = vsyncpa [#allocation3], 0
    %s11 = scalar_lea.sflag [#allocation3], 1
    %12 = vsyncpa %s11, 0
    %13 = vsyncpa [#allocation8], 0
    %s14 = scalar_lea.sflag [#allocation8], 1
    %15 = vsyncpa %s14, 0
    %16 = vsyncpa [#allocation4], 0
    %s17 = scalar_lea.sflag [#allocation4], 1
    %18 = vsyncpa %s17, 0
    loop: start=0, step=1, limit=6
    $region2: #{tpu_custom_call.1} parent=1 // loop_pre_header
      _
    $region3: #{tpu_custom_call.1} parent=1 // loop_header
      %s20 = sphi 0, %s24
      %p21 = scmp.ge.s32.totalorder %s20, 6
      %s27 = sphi 0, %s39
      %s28 = sphi 0, %s35
      %s29 = sphi 0, %s27
      %s30 = sphi 0, %s28
      %s31 = sphi 0, %s29
      %s32 = sphi 0, %s30
      %s40 = sphi 0, %s40
      %s42 = sphi 0, %s40
      %s43 = sphi 0, %s42
      %s57 = sphi 0, %s43
      %s65 = sphi 0, %s67
      %s68 = sphi 0, %s65
      %s69 = sphi 0, %s68
      %s85 = sphi 0, %s69
      %s93 = sphi 0, %s95
      %s96 = sphi 0, %s93
      %s97 = sphi 0, %s96
      %s113 = sphi 0, %s97
      %s121 = sphi 0, %s123
      %s124 = sphi 0, %s121
      %s125 = sphi 0, %s124
      %s141 = sphi 0, %s125
      %s149 = sphi 0, %s151
      %s152 = sphi 0, %s149
      %s153 = sphi 0, %s152
      %s169 = sphi 0, %s153
    $region4: #{tpu_custom_call.1} parent=1 // loop_header_branch
      %23 = sbr.rel (%p21) target = $region8
    $region5: #{tpu_custom_call.1} parent=1 // loop_body
      %s25 = ssub.s32 %s20, 1
      %s26 = ssub.s32 %s20, 2
      %s33 = sadd.s32 1, %s28
      %p34 = scmp.ge.s32.totalorder %s33, 2
      %s35 = scalar_select %p34, 0, %s33
      %s36 = sadd.s32 1, %s27
      %s37 = scalar_select %p34, %s36, %s27
      %p38 = scmp.ge.s32.totalorder %s37, 2
      %s39 = scalar_select %p38, 0, %s37
      %s41 = sadd.s32 %s40, 1
      %p44 = scmp.eq.s32.totalorder %s20, 3
      %p45 = scmp.ne.s32.totalorder %s40, %s42
      %p46 = scmp.eq.s32.totalorder %s20, 0
      %p47 = por %p45, %p46
      %p48 = scmp.ne.s32.totalorder %s40, %s42
      %p49 = scmp.eq.s32.totalorder %s25, 3
      %p50 = por %p48, %p49
      %p51 = scmp.ne.s32.totalorder %s42, %s43
      %p52 = scmp.eq.s32.totalorder %s25, 0
      %p53 = por %p51, %p52
      %p54 = scmp.ne.s32.totalorder %s42, %s43
      %p55 = scmp.eq.s32.totalorder %s26, 3
      %p56 = por %p54, %p55
      %p58 = scmp.ne.s32.totalorder %s43, %s57
      %p59 = scmp.eq.s32.totalorder %s26, 0
      %p60 = por %p58, %p59
      %s61 = ssub.s32 %s27, %s39
      %s62 = ssub.s32 %s28, %s35
      %s63 = sor.u32 %s61, %s62
      %p64 = scmp.eq.s32.totalorder %s63, 0
      %s66 = sadd.s32 %s65, 1
      %s67 = scalar_select %p64, %s65, %s66
      %p70 = pneg %p64
      %p71 = scmp.eq.s32.totalorder %s20, 3
      %p72 = por %p70, %p71
      %p73 = scmp.ne.s32.totalorder %s65, %s68
      %p74 = scmp.eq.s32.totalorder %s20, 0
      %p75 = por %p73, %p74
      %p76 = scmp.ne.s32.totalorder %s65, %s68
      %p77 = scmp.eq.s32.totalorder %s25, 3
      %p78 = por %p76, %p77
      %p79 = scmp.ne.s32.totalorder %s68, %s69
      %p80 = scmp.eq.s32.totalorder %s25, 0
      %p81 = por %p79, %p80
      %p82 = scmp.ne.s32.totalorder %s68, %s69
      %p83 = scmp.eq.s32.totalorder %s26, 3
      %p84 = por %p82, %p83
      %p86 = scmp.ne.s32.totalorder %s69, %s85
      %p87 = scmp.eq.s32.totalorder %s26, 0
      %p88 = por %p86, %p87
      %s89 = ssub.s32 %s27, %s39
      %s90 = ssub.s32 %s28, %s35
      %s91 = sor.u32 %s89, %s90
      %p92 = scmp.eq.s32.totalorder %s91, 0
      %s94 = sadd.s32 %s93, 1
      %s95 = scalar_select %p92, %s93, %s94
      %p98 = pneg %p92
      %p99 = scmp.eq.s32.totalorder %s20, 3
      %p100 = por %p98, %p99
      %p101 = scmp.ne.s32.totalorder %s93, %s96
      %p102 = scmp.eq.s32.totalorder %s20, 0
      %p103 = por %p101, %p102
      %p104 = scmp.ne.s32.totalorder %s93, %s96
      %p105 = scmp.eq.s32.totalorder %s25, 3
      %p106 = por %p104, %p105
      %p107 = scmp.ne.s32.totalorder %s96, %s97
      %p108 = scmp.eq.s32.totalorder %s25, 0
      %p109 = por %p107, %p108
      %p110 = scmp.ne.s32.totalorder %s96, %s97
      %p111 = scmp.eq.s32.totalorder %s26, 3
      %p112 = por %p110, %p111
      %p114 = scmp.ne.s32.totalorder %s97, %s113
      %p115 = scmp.eq.s32.totalorder %s26, 0
      %p116 = por %p114, %p115
      %s117 = ssub.s32 %s27, %s39
      %s118 = ssub.s32 %s28, %s35
      %s119 = sor.u32 %s117, %s118
      %p120 = scmp.eq.s32.totalorder %s119, 0
      %s122 = sadd.s32 %s121, 1
      %s123 = scalar_select %p120, %s121, %s122
      %p126 = pneg %p120
      %p127 = scmp.eq.s32.totalorder %s20, 3
      %p128 = por %p126, %p127
      %p129 = scmp.ne.s32.totalorder %s121, %s124
      %p130 = scmp.eq.s32.totalorder %s20, 0
      %p131 = por %p129, %p130
      %p132 = scmp.ne.s32.totalorder %s121, %s124
      %p133 = scmp.eq.s32.totalorder %s25, 3
      %p134 = por %p132, %p133
      %p135 = scmp.ne.s32.totalorder %s124, %s125
      %p136 = scmp.eq.s32.totalorder %s25, 0
      %p137 = por %p135, %p136
      %p138 = scmp.ne.s32.totalorder %s124, %s125
      %p139 = scmp.eq.s32.totalorder %s26, 3
      %p140 = por %p138, %p139
      %p142 = scmp.ne.s32.totalorder %s125, %s141
      %p143 = scmp.eq.s32.totalorder %s26, 0
      %p144 = por %p142, %p143
      %s145 = ssub.s32 %s27, %s39
      %s146 = ssub.s32 %s28, %s35
      %s147 = sor.u32 %s145, %s146
      %p148 = scmp.eq.s32.totalorder %s147, 0
      %s150 = sadd.s32 %s149, 1
      %s151 = scalar_select %p148, %s149, %s150
      %p154 = pneg %p148
      %p155 = scmp.eq.s32.totalorder %s20, 3
      %p156 = por %p154, %p155
      %p157 = scmp.ne.s32.totalorder %s149, %s152
      %p158 = scmp.eq.s32.totalorder %s20, 0
      %p159 = por %p157, %p158
      %p160 = scmp.ne.s32.totalorder %s149, %s152
      %p161 = scmp.eq.s32.totalorder %s25, 3
      %p162 = por %p160, %p161
      %p163 = scmp.ne.s32.totalorder %s152, %s153
      %p164 = scmp.eq.s32.totalorder %s25, 0
      %p165 = por %p163, %p164
      %p166 = scmp.ne.s32.totalorder %s152, %s153
      %p167 = scmp.eq.s32.totalorder %s26, 3
      %p168 = por %p166, %p167
      %p170 = scmp.ne.s32.totalorder %s153, %s169
      %p171 = scmp.eq.s32.totalorder %s26, 0
      %p172 = por %p170, %p171
      %p173 = scmp.le.s32.totalorder 1, %s20
      %p174 = scmp.lt.s32.totalorder %s20, 5
      %p175 = pnand %p173, %p174
      %p176 = pneg %p175
      // Predicated region
      $region9: #{tpu_custom_call.1} parent=5 // pred_check
        _
      $region10: #{tpu_custom_call.1} parent=5 // pred_check_branch
        %178 = sbr.rel (%p175) target = $region12
      $region11: #{tpu_custom_call.1} parent=5 // pred_region
        %s179 = ssub.s32 %s20, 1
        // Predicated region
        $region13: #{tpu_custom_call.1} parent=11 // pred_check
          %p180 = pneg %p53
        $region14: #{tpu_custom_call.1} parent=11 // pred_check_branch
          %182 = sbr.rel (%p180) target = $region16
        $region15: #{tpu_custom_call.1} parent=11 // pred_region
          %184 = vsyncadd [#allocation5], 0
          %s186 = sshll.u32 %s0, 4
          %s187 = int_to_ptr.hbm [resolvable:$true] %s186
          %189 = dma.hbm_to_smem %s187, 16, [#allocation2], [#allocation5]
        $region16: #{tpu_custom_call.1} parent=11 // pred_fallthru
          _
      $region12: #{tpu_custom_call.1} parent=5 // pred_fallthru
        _
      %p190 = scmp.lt.s32.totalorder %s20, 4
      // Predicated region
      $region17: #{tpu_custom_call.1} parent=5 // pred_check
        %p191 = pneg %p190
      $region18: #{tpu_custom_call.1} parent=5 // pred_check_branch
        %193 = sbr.rel (%p191) target = $region20
      $region19: #{tpu_custom_call.1} parent=5 // pred_region
        // Predicated region
        $region21: #{tpu_custom_call.1} parent=19 // pred_check
          %p194 = pneg %p75
        $region22: #{tpu_custom_call.1} parent=19 // pred_check_branch
          %196 = sbr.rel (%p194) target = $region24
        $region23: #{tpu_custom_call.1} parent=19 // pred_region
          %s197 = sand.u32 %s65, 1
          %s198 = scalar_lea.sflag [#allocation3], %s197
          %s199 = sand.u32 %s65, 1
          %s200 = smul.addr %s199, 4
          %s201 = scalar_lea.vmem [#allocation6], %s200
          %203 = vsyncadd %s198, 0
          %s204 = smul.addr %s28, 2
          %s205 = smul.addr %s27, 4
          %s206 = sadd.s32 %s204, %s205
          %s207 = smul.addr %s206, 2
          %s208 = scalar_lea.hbm %s1, %s207
          %s210 = sshll.u32 %s208, 4
          %s211 = int_to_ptr.hbm [resolvable:$true] %s210
          %s212 = sshll.u32 %s201, 4
          %s213 = int_to_ptr.vmem [resolvable:$true] %s212
          %215 = dma.hbm_to_vmem [thread:$0]  %s211, 64, %s213, %s198
        $region24: #{tpu_custom_call.1} parent=19 // pred_fallthru
          _
        // Predicated region
        $region25: #{tpu_custom_call.1} parent=19 // pred_check
          %p216 = pneg %p103
        $region26: #{tpu_custom_call.1} parent=19 // pred_check_branch
          %218 = sbr.rel (%p216) target = $region28
        $region27: #{tpu_custom_call.1} parent=19 // pred_region
          %s219 = sand.u32 %s20, 1
          %s220 = scalar_lea.sflag [#allocation8], %s219
          %s221 = sand.u32 %s93, 1
          %s222 = smul.addr %s221, 16
          %s223 = scalar_lea.vmem [#allocation7], %s222
          %225 = vsyncadd %s220, 0
          %s226 = smul.addr %s28, 2
          %s227 = smul.addr %s27, 4
          %s228 = sadd.s32 %s226, %s227
          %s229 = smul.addr %s228, 8
          %s230 = scalar_lea.hbm %s2, %s229
          %s232 = sshll.u32 %s230, 4
          %s233 = int_to_ptr.hbm [resolvable:$true] %s232
          %s234 = sshll.u32 %s223, 4
          %s235 = int_to_ptr.vmem [resolvable:$true] %s234
          %237 = dma.hbm_to_vmem [thread:$0]  %s233, 256, %s235, %s220
        $region28: #{tpu_custom_call.1} parent=19 // pred_fallthru
          _
        // Predicated region
        $region29: #{tpu_custom_call.1} parent=19 // pred_check
          %p238 = pneg %p131
        $region30: #{tpu_custom_call.1} parent=19 // pred_check_branch
          %240 = sbr.rel (%p238) target = $region32
        $region31: #{tpu_custom_call.1} parent=19 // pred_region
          %s241 = sand.u32 %s20, 1
          %s242 = scalar_lea.sflag [#allocation8], %s241
          %s243 = sand.u32 %s121, 1
          %s244 = smul.addr %s243, 16
          %s245 = scalar_lea.vmem [#allocation9], %s244
          %247 = vsyncadd %s242, 0
          %s248 = smul.addr %s28, 2
          %s249 = smul.addr %s27, 4
          %s250 = sadd.s32 %s248, %s249
          %s251 = smul.addr %s250, 8
          %s252 = scalar_lea.hbm %s3, %s251
          %s254 = sshll.u32 %s252, 4
          %s255 = int_to_ptr.hbm [resolvable:$true] %s254
          %s256 = sshll.u32 %s245, 4
          %s257 = int_to_ptr.vmem [resolvable:$true] %s256
          %259 = dma.hbm_to_vmem [thread:$0]  %s255, 256, %s257, %s242
        $region32: #{tpu_custom_call.1} parent=19 // pred_fallthru
          _
      $region20: #{tpu_custom_call.1} parent=5 // pred_fallthru
        _
      %p260 = scmp.le.s32.totalorder 1, %s20
      %p261 = scmp.lt.s32.totalorder %s20, 5
      %p262 = pnand %p260, %p261
      %p263 = pneg %p262
      // Predicated region
      $region33: #{tpu_custom_call.1} parent=5 // pred_check
        _
      $region34: #{tpu_custom_call.1} parent=5 // pred_check_branch
        %265 = sbr.rel (%p262) target = $region36
      $region35: #{tpu_custom_call.1} parent=5 // pred_region
        %s266 = ssub.s32 %s20, 1
        // Predicated region
        $region37: #{tpu_custom_call.1} parent=35 // pred_check
          %p267 = pneg %p53
        $region38: #{tpu_custom_call.1} parent=35 // pred_check_branch
          %269 = sbr.rel (%p267) target = $region40
        $region39: #{tpu_custom_call.1} parent=35 // pred_region
          %271 = dma.done [#allocation5], 16
        $region40: #{tpu_custom_call.1} parent=35 // pred_fallthru
          _
        %s272 = sand.u32 %s68, 1
        %s273 = scalar_lea.sflag [#allocation3], %s272
        %s274 = sand.u32 %s68, 1
        %s275 = smul.addr %s274, 4
        %s276 = scalar_lea.vmem [#allocation6], %s275
        // Predicated region
        $region41: #{tpu_custom_call.1} parent=35 // pred_check
          %p277 = pneg %p81
        $region42: #{tpu_custom_call.1} parent=35 // pred_check_branch
          %279 = sbr.rel (%p277) target = $region44
        $region43: #{tpu_custom_call.1} parent=35 // pred_region
          %281 = dma.done %s273, 64
        $region44: #{tpu_custom_call.1} parent=35 // pred_fallthru
          _
        %s282 = sand.u32 %s25, 1
        %s283 = scalar_lea.sflag [#allocation8], %s282
        %s284 = sand.u32 %s96, 1
        %s285 = smul.addr %s284, 16
        %s286 = scalar_lea.vmem [#allocation7], %s285
        // Predicated region
        $region45: #{tpu_custom_call.1} parent=35 // pred_check
          %p287 = pneg %p109
        $region46: #{tpu_custom_call.1} parent=35 // pred_check_branch
          %289 = sbr.rel (%p287) target = $region48
        $region47: #{tpu_custom_call.1} parent=35 // pred_region
          %291 = dma.done %s283, 256
        $region48: #{tpu_custom_call.1} parent=35 // pred_fallthru
          _
        %s292 = sand.u32 %s25, 1
        %s293 = scalar_lea.sflag [#allocation8], %s292
        %s294 = sand.u32 %s124, 1
        %s295 = smul.addr %s294, 16
        %s296 = scalar_lea.vmem [#allocation9], %s295
        // Predicated region
        $region49: #{tpu_custom_call.1} parent=35 // pred_check
          %p297 = pneg %p137
        $region50: #{tpu_custom_call.1} parent=35 // pred_check_branch
          %299 = sbr.rel (%p297) target = $region52
        $region51: #{tpu_custom_call.1} parent=35 // pred_region
          %301 = dma.done %s293, 256
        $region52: #{tpu_custom_call.1} parent=35 // pred_fallthru
          _
        %302 = sfence
        %p303 = pneg %p53
        %p304 = pneg %p50
        %s305 = sand.u32 %s68, 1
        %s306 = scalar_lea.sflag [#allocation3], %s305
        %s307 = sand.u32 %s68, 1
        %s308 = smul.addr %s307, 4
        %s309 = scalar_lea.vmem [#allocation6], %s308
        %p310 = pneg %p81
        %p311 = pneg %p78
        %s312 = sand.u32 %s25, 1
        %s313 = scalar_lea.sflag [#allocation8], %s312
        %s314 = sand.u32 %s96, 1
        %s315 = smul.addr %s314, 16
        %s316 = scalar_lea.vmem [#allocation7], %s315
        %p317 = pneg %p109
        %p318 = pneg %p106
        %s319 = sand.u32 %s25, 1
        %s320 = scalar_lea.sflag [#allocation8], %s319
        %s321 = sand.u32 %s124, 1
        %s322 = smul.addr %s321, 16
        %s323 = scalar_lea.vmem [#allocation9], %s322
        %p324 = pneg %p137
        %p325 = pneg %p134
        %p326 = pneg %p165
        %p327 = pneg %p162
        %s328 = sand.u32 %s152, 1
        %s329 = scalar_lea.sflag [#allocation4], %s328
        %s330 = sand.u32 %s152, 1
        %s331 = smul.addr %s330, 16
        %s332 = scalar_lea.vmem [#allocation10], %s331
        %v333 = vld [vmem:[%s286] sm:$0xff]
        %v334 = vld [vmem:[%s286 + $0x8] sm:$0xff]
        %v335 = vand.u32 2147483647, %v333
        %vm336 = vcmp.le.f32.partialorder %v335, 0.7853982
        %vm337 = vcmp.lt.s32.totalorder %v333, 0
        %v338 = vand.u32 %v333, 2139095040
        %v339 = vshrl.u32 %v338, 23
        %v340 = vsub.s32 %v339, 127
        %v341 = vand.u32 2147483647, %v333
        %v342 = vand.u32 %v341, 8388607
        %v343 = vor.u32 %v342, 8388608
        %v344 = vsub.s32 0, %v343
        %v345 = vadd.s32 %v340, 1
        %vm346 = vcmp.gt.s32.totalorder %v345, 0
        %v347 = vsel %vm346, %v345, 0
        %v348 = vshrl.u32 %v347, 5
        %v349 = vand.u32 %v347, 31
        %v350 = vsub.s32 32, %v349
        %v351 = vshrl.u32 683565275, %v350
        %v352 = vshll.u32 683565275, %v349
        %v353 = vshrl.u32 2475754826, %v350
        %v354 = vor.u32 %v352, %v353
        %v355 = vshll.u32 2475754826, %v349
        %v356 = vshrl.u32 2131351028, %v350
        %v357 = vor.u32 %v355, %v356
        %v358 = vshll.u32 2131351028, %v349
        %v359 = vshrl.u32 2102212464, %v350
        %v360 = vor.u32 %v358, %v359
        %v361 = vshll.u32 2102212464, %v349
        %v362 = vshrl.u32 920167782, %v350
        %v363 = vor.u32 %v361, %v362
        %v364 = vshll.u32 920167782, %v349
        %v365 = vshrl.u32 1326507024, %v350
        %v366 = vor.u32 %v364, %v365
        %vm367 = vcmp.lt.s32.totalorder %v348, 1
        %vm368 = vcmp.lt.s32.totalorder %v348, 2
        %vm369 = vcmp.lt.s32.totalorder %v348, 3
        %vm370 = vcmp.lt.s32.totalorder %v348, 4
        %v371 = vsel %vm367, %v351, %v354
        %v372 = vsel %vm370, %v360, 2102212464
        %v373 = vsel %vm369, %v357, %v372
        %v374 = vsel %vm368, %v371, %v373
        %v375 = vsel %vm367, %v354, %v357
        %v376 = vsel %vm370, %v363, 920167782
        %v377 = vsel %vm369, %v360, %v376
        %v378 = vsel %vm368, %v375, %v377
        %v379 = vsel %vm367, %v357, %v360
        %v380 = vsel %vm370, %v366, 1326507024
        %v381 = vsel %vm369, %v363, %v380
        %v382 = vsel %vm368, %v379, %v381
        %v383 = vshll.u32 %v343, 8
        %v384 = vand.u32 %v383, 65535
        %v385 = vshrl.u32 %v383, 16
        %v386 = vand.u32 %v382, 65535
        %v387 = vshrl.u32 %v382, 16
        %v388 = vmul.u32 %v384, %v386
        %v389 = vmul.u32 %v384, %v387
        %v390 = vmul.u32 %v385, %v386
        %v391 = vmul.u32 %v385, %v387
        %v392 = vshll.u32 %v389, 16
        %v393 = vshrl.u32 %v389, 16
        %v394 = vshll.u32 %v390, 16
        %v395 = vshrl.u32 %v390, 16
        %vm396 = vc.u32 %v388, %v392
        %v397 = vsel %vm396, 1, 0
        %v398 = vadd.s32 %v388, %v392
        %v399 = vadd.s32 %v391, %v397
        %vm400 = vc.u32 %v398, %v394
        %v401 = vsel %vm400, 1, 0
        %v402 = vadd.s32 %v398, %v394
        %v403 = vadd.s32 %v399, %v401
        %v404 = vadd.s32 %v403, %v393
        %v405 = vadd.s32 %v404, %v395
        %v406 = vand.u32 %v383, 65535
        %v407 = vshrl.u32 %v383, 16
        %v408 = vand.u32 %v378, 65535
        %v409 = vshrl.u32 %v378, 16
        %v410 = vmul.u32 %v406, %v408
        %v411 = vmul.u32 %v406, %v409
        %v412 = vmul.u32 %v407, %v408
        %v413 = vmul.u32 %v407, %v409
        %v414 = vshll.u32 %v411, 16
        %v415 = vshrl.u32 %v411, 16
        %v416 = vshll.u32 %v412, 16
        %v417 = vshrl.u32 %v412, 16
        %vm418 = vc.u32 %v410, %v414
        %v419 = vsel %vm418, 1, 0
        %v420 = vadd.s32 %v410, %v414
        %v421 = vadd.s32 %v413, %v419
        %vm422 = vc.u32 %v420, %v416
        %v423 = vsel %vm422, 1, 0
        %v424 = vadd.s32 %v420, %v416
        %v425 = vadd.s32 %v421, %v423
        %v426 = vadd.s32 %v425, %v415
        %v427 = vadd.s32 %v426, %v417
        %v428 = vmul.u32 %v383, %v374
        %v429 = vadd.s32 %v405, %v424
        %vm430 = vc.u32 %v405, %v424
        %v431 = vadd.s32 %v427, 1
        %v432 = vsel %vm430, %v431, %v427
        %v433 = vadd.s32 %v428, %v432
        %v434 = vadd.s32 %v433, 536870912
        %v435 = vshrl.u32 %v434, 30
        %v436 = vshll.u32 %v435, 30
        %v437 = vsub.s32 %v433, %v436
        %vm438 = vcmp.lt.s32.totalorder %v437, 0
        %v439 = vsub.s32 0, %v437
        %v440 = vsel %vm438, %v439, %v437
        %v441 = vclz %v440
        %v442 = vsub.s32 %v441, 2
        %vm443 = vcmp.gt.s32.totalorder 0, %v442
        %v444 = vsel %vm443, 0, %v442
        %v445 = vsub.s32 32, %v444
        %v446 = vshll.u32 %v437, %v444
        %v447 = vshrl.u32 %v429, %v445
        %v448 = vor.u32 %v446, %v447
        %v449 = vsub.s32 4294967266, %v444
        %v450 = vadd.s32 %v449, 127
        %v451 = vshll.u32 %v450, 23
        %v452 = vor.u32 4788187, %v451
        %v453 = vand.u32 2147483647, %v452
        %v455 = vcvt.s32.f32 %v448
        %v456 = vmul.f32 %v455, %v453
        %v457 = vxor.u32 %v456, 2147483648
        %v458 = vsel %vm337, %v457, %v456
        %v459 = vsub.s32 4, %v435
        %v460 = vsel %vm337, %v459, %v435
        %v461 = vsel %vm336, %v333, %v458
        %v462 = vsel %vm336, 0, %v460
        %v463 = vmul.f32 %v461, %v461
        %v464 = vmul.f32 %v463, -0.001358992
        %v465 = vadd.f32 %v464, 0.041655596
        %v466 = vmul.f32 %v463, %v465
        %v467 = vadd.f32 %v466, -0.4999988
        %v468 = vmul.f32 %v463, %v467
        %v469 = vadd.f32 1.0, %v468
        %v470 = vmul.f32 %v461, %v461
        %v471 = vmul.f32 %v470, -0.00019511016
        %v472 = vadd.f32 %v471, 0.008332121
        %v473 = vmul.f32 %v470, %v472
        %v474 = vadd.f32 %v473, -0.16666654
        %v475 = vmul.f32 %v470, %v474
        %v476 = vadd.f32 %v475, 1.0
        %v477 = vmul.f32 %v476, %v461
        %vm478 = vweird.f32 %v333
        %v479 = vand.u32 %v462, 3
        %vm480 = vcmp.lt.s32.totalorder %v479, 2
        %vm481 = vcmp.eq.s32.totalorder %v479, 0
        %v482 = vxor.u32 %v477, 2147483648
        %v483 = vsel %vm481, %v469, %v482
        %vm484 = vcmp.eq.s32.totalorder %v479, 2
        %v485 = vxor.u32 %v469, 2147483648
        %v486 = vsel %vm484, %v485, %v477
        %v487 = vsel %vm480, %v483, %v486
        %v488 = vsel %vm478, nan, %v487
        %v489 = vand.u32 2147483647, %v334
        %vm490 = vcmp.le.f32.partialorder %v489, 0.7853982
        %vm491 = vcmp.lt.s32.totalorder %v334, 0
        %v492 = vand.u32 %v334, 2139095040
        %v493 = vshrl.u32 %v492, 23
        %v494 = vsub.s32 %v493, 127
        %v495 = vand.u32 2147483647, %v334
        %v496 = vand.u32 %v495, 8388607
        %v497 = vor.u32 %v496, 8388608
        %v498 = vsub.s32 0, %v497
        %v499 = vadd.s32 %v494, 1
        %vm500 = vcmp.gt.s32.totalorder %v499, 0
        %v501 = vsel %vm500, %v499, 0
        %v502 = vshrl.u32 %v501, 5
        %v503 = vand.u32 %v501, 31
        %v504 = vsub.s32 32, %v503
        %v505 = vshrl.u32 683565275, %v504
        %v506 = vshll.u32 683565275, %v503
        %v507 = vshrl.u32 2475754826, %v504
        %v508 = vor.u32 %v506, %v507
        %v509 = vshll.u32 2475754826, %v503
        %v510 = vshrl.u32 2131351028, %v504
        %v511 = vor.u32 %v509, %v510
        %v512 = vshll.u32 2131351028, %v503
        %v513 = vshrl.u32 2102212464, %v504
        %v514 = vor.u32 %v512, %v513
        %v515 = vshll.u32 2102212464, %v503
        %v516 = vshrl.u32 920167782, %v504
        %v517 = vor.u32 %v515, %v516
        %v518 = vshll.u32 920167782, %v503
        %v519 = vshrl.u32 1326507024, %v504
        %v520 = vor.u32 %v518, %v519
        %vm521 = vcmp.lt.s32.totalorder %v502, 1
        %vm522 = vcmp.lt.s32.totalorder %v502, 2
        %vm523 = vcmp.lt.s32.totalorder %v502, 3
        %vm524 = vcmp.lt.s32.totalorder %v502, 4
        %v525 = vsel %vm521, %v505, %v508
        %v526 = vsel %vm524, %v514, 2102212464
        %v527 = vsel %vm523, %v511, %v526
        %v528 = vsel %vm522, %v525, %v527
        %v529 = vsel %vm521, %v508, %v511
        %v530 = vsel %vm524, %v517, 920167782
        %v531 = vsel %vm523, %v514, %v530
        %v532 = vsel %vm522, %v529, %v531
        %v533 = vsel %vm521, %v511, %v514
        %v534 = vsel %vm524, %v520, 1326507024
        %v535 = vsel %vm523, %v517, %v534
        %v536 = vsel %vm522, %v533, %v535
        %v537 = vshll.u32 %v497, 8
        %v538 = vand.u32 %v537, 65535
        %v539 = vshrl.u32 %v537, 16
        %v540 = vand.u32 %v536, 65535
        %v541 = vshrl.u32 %v536, 16
        %v542 = vmul.u32 %v538, %v540
        %v543 = vmul.u32 %v538, %v541
        %v544 = vmul.u32 %v539, %v540
        %v545 = vmul.u32 %v539, %v541
        %v546 = vshll.u32 %v543, 16
        %v547 = vshrl.u32 %v543, 16
        %v548 = vshll.u32 %v544, 16
        %v549 = vshrl.u32 %v544, 16
        %vm550 = vc.u32 %v542, %v546
        %v551 = vsel %vm550, 1, 0
        %v552 = vadd.s32 %v542, %v546
        %v553 = vadd.s32 %v545, %v551
        %vm554 = vc.u32 %v552, %v548
        %v555 = vsel %vm554, 1, 0
        %v556 = vadd.s32 %v552, %v548
        %v557 = vadd.s32 %v553, %v555
        %v558 = vadd.s32 %v557, %v547
        %v559 = vadd.s32 %v558, %v549
        %v560 = vand.u32 %v537, 65535
        %v561 = vshrl.u32 %v537, 16
        %v562 = vand.u32 %v532, 65535
        %v563 = vshrl.u32 %v532, 16
        %v564 = vmul.u32 %v560, %v562
        %v565 = vmul.u32 %v560, %v563
        %v566 = vmul.u32 %v561, %v562
        %v567 = vmul.u32 %v561, %v563
        %v568 = vshll.u32 %v565, 16
        %v569 = vshrl.u32 %v565, 16
        %v570 = vshll.u32 %v566, 16
        %v571 = vshrl.u32 %v566, 16
        %vm572 = vc.u32 %v564, %v568
        %v573 = vsel %vm572, 1, 0
        %v574 = vadd.s32 %v564, %v568
        %v575 = vadd.s32 %v567, %v573
        %vm576 = vc.u32 %v574, %v570
        %v577 = vsel %vm576, 1, 0
        %v578 = vadd.s32 %v574, %v570
        %v579 = vadd.s32 %v575, %v577
        %v580 = vadd.s32 %v579, %v569
        %v581 = vadd.s32 %v580, %v571
        %v582 = vmul.u32 %v537, %v528
        %v583 = vadd.s32 %v559, %v578
        %vm584 = vc.u32 %v559, %v578
        %v585 = vadd.s32 %v581, 1
        %v586 = vsel %vm584, %v585, %v581
        %v587 = vadd.s32 %v582, %v586
        %v588 = vadd.s32 %v587, 536870912
        %v589 = vshrl.u32 %v588, 30
        %v590 = vshll.u32 %v589, 30
        %v591 = vsub.s32 %v587, %v590
        %vm592 = vcmp.lt.s32.totalorder %v591, 0
        %v593 = vsub.s32 0, %v591
        %v594 = vsel %vm592, %v593, %v591
        %v595 = vclz %v594
        %v596 = vsub.s32 %v595, 2
        %vm597 = vcmp.gt.s32.totalorder 0, %v596
        %v598 = vsel %vm597, 0, %v596
        %v599 = vsub.s32 32, %v598
        %v600 = vshll.u32 %v591, %v598
        %v601 = vshrl.u32 %v583, %v599
        %v602 = vor.u32 %v600, %v601
        %v603 = vsub.s32 4294967266, %v598
        %v604 = vadd.s32 %v603, 127
        %v605 = vshll.u32 %v604, 23
        %v606 = vor.u32 4788187, %v605
        %v607 = vand.u32 2147483647, %v606
        %v609 = vcvt.s32.f32 %v602
        %v610 = vmul.f32 %v609, %v607
        %v611 = vxor.u32 %v610, 2147483648
        %v612 = vsel %vm491, %v611, %v610
        %v613 = vsub.s32 4, %v589
        %v614 = vsel %vm491, %v613, %v589
        %v615 = vsel %vm490, %v334, %v612
        %v616 = vsel %vm490, 0, %v614
        %v617 = vmul.f32 %v615, %v615
        %v618 = vmul.f32 %v617, -0.001358992
        %v619 = vadd.f32 %v618, 0.041655596
        %v620 = vmul.f32 %v617, %v619
        %v621 = vadd.f32 %v620, -0.4999988
        %v622 = vmul.f32 %v617, %v621
        %v623 = vadd.f32 1.0, %v622
        %v624 = vmul.f32 %v615, %v615
        %v625 = vmul.f32 %v624, -0.00019511016
        %v626 = vadd.f32 %v625, 0.008332121
        %v627 = vmul.f32 %v624, %v626
        %v628 = vadd.f32 %v627, -0.16666654
        %v629 = vmul.f32 %v624, %v628
        %v630 = vadd.f32 %v629, 1.0
        %v631 = vmul.f32 %v630, %v615
        %vm632 = vweird.f32 %v334
        %v633 = vand.u32 %v616, 3
        %vm634 = vcmp.lt.s32.totalorder %v633, 2
        %vm635 = vcmp.eq.s32.totalorder %v633, 0
        %v636 = vxor.u32 %v631, 2147483648
        %v637 = vsel %vm635, %v623, %v636
        %vm638 = vcmp.eq.s32.totalorder %v633, 2
        %v639 = vxor.u32 %v623, 2147483648
        %v640 = vsel %vm638, %v639, %v631
        %v641 = vsel %vm634, %v637, %v640
        %v642 = vsel %vm632, nan, %v641
        %v643 = vand.u32 2147483647, %v333
        %vm644 = vcmp.le.f32.partialorder %v643, 0.7853982
        %vm645 = vcmp.lt.s32.totalorder %v333, 0
        %v646 = vand.u32 %v333, 2139095040
        %v647 = vshrl.u32 %v646, 23
        %v648 = vsub.s32 %v647, 127
        %v649 = vand.u32 2147483647, %v333
        %v650 = vand.u32 %v649, 8388607
        %v651 = vor.u32 %v650, 8388608
        %v652 = vsub.s32 0, %v651
        %v653 = vadd.s32 %v648, 1
        %vm654 = vcmp.gt.s32.totalorder %v653, 0
        %v655 = vsel %vm654, %v653, 0
        %v656 = vshrl.u32 %v655, 5
        %v657 = vand.u32 %v655, 31
        %v658 = vsub.s32 32, %v657
        %v659 = vshrl.u32 683565275, %v658
        %v660 = vshll.u32 683565275, %v657
        %v661 = vshrl.u32 2475754826, %v658
        %v662 = vor.u32 %v660, %v661
        %v663 = vshll.u32 2475754826, %v657
        %v664 = vshrl.u32 2131351028, %v658
        %v665 = vor.u32 %v663, %v664
        %v666 = vshll.u32 2131351028, %v657
        %v667 = vshrl.u32 2102212464, %v658
        %v668 = vor.u32 %v666, %v667
        %v669 = vshll.u32 2102212464, %v657
        %v670 = vshrl.u32 920167782, %v658
        %v671 = vor.u32 %v669, %v670
        %v672 = vshll.u32 920167782, %v657
        %v673 = vshrl.u32 1326507024, %v658
        %v674 = vor.u32 %v672, %v673
        %vm675 = vcmp.lt.s32.totalorder %v656, 1
        %vm676 = vcmp.lt.s32.totalorder %v656, 2
        %vm677 = vcmp.lt.s32.totalorder %v656, 3
        %vm678 = vcmp.lt.s32.totalorder %v656, 4
        %v679 = vsel %vm675, %v659, %v662
        %v680 = vsel %vm678, %v668, 2102212464
        %v681 = vsel %vm677, %v665, %v680
        %v682 = vsel %vm676, %v679, %v681
        %v683 = vsel %vm675, %v662, %v665
        %v684 = vsel %vm678, %v671, 920167782
        %v685 = vsel %vm677, %v668, %v684
        %v686 = vsel %vm676, %v683, %v685
        %v687 = vsel %vm675, %v665, %v668
        %v688 = vsel %vm678, %v674, 1326507024
        %v689 = vsel %vm677, %v671, %v688
        %v690 = vsel %vm676, %v687, %v689
        %v691 = vshll.u32 %v651, 8
        %v692 = vand.u32 %v691, 65535
        %v693 = vshrl.u32 %v691, 16
        %v694 = vand.u32 %v690, 65535
        %v695 = vshrl.u32 %v690, 16
        %v696 = vmul.u32 %v692, %v694
        %v697 = vmul.u32 %v692, %v695
        %v698 = vmul.u32 %v693, %v694
        %v699 = vmul.u32 %v693, %v695
        %v700 = vshll.u32 %v697, 16
        %v701 = vshrl.u32 %v697, 16
        %v702 = vshll.u32 %v698, 16
        %v703 = vshrl.u32 %v698, 16
        %vm704 = vc.u32 %v696, %v700
        %v705 = vsel %vm704, 1, 0
        %v706 = vadd.s32 %v696, %v700
        %v707 = vadd.s32 %v699, %v705
        %vm708 = vc.u32 %v706, %v702
        %v709 = vsel %vm708, 1, 0
        %v710 = vadd.s32 %v706, %v702
        %v711 = vadd.s32 %v707, %v709
        %v712 = vadd.s32 %v711, %v701
        %v713 = vadd.s32 %v712, %v703
        %v714 = vand.u32 %v691, 65535
        %v715 = vshrl.u32 %v691, 16
        %v716 = vand.u32 %v686, 65535
        %v717 = vshrl.u32 %v686, 16
        %v718 = vmul.u32 %v714, %v716
        %v719 = vmul.u32 %v714, %v717
        %v720 = vmul.u32 %v715, %v716
        %v721 = vmul.u32 %v715, %v717
        %v722 = vshll.u32 %v719, 16
        %v723 = vshrl.u32 %v719, 16
        %v724 = vshll.u32 %v720, 16
        %v725 = vshrl.u32 %v720, 16
        %vm726 = vc.u32 %v718, %v722
        %v727 = vsel %vm726, 1, 0
        %v728 = vadd.s32 %v718, %v722
        %v729 = vadd.s32 %v721, %v727
        %vm730 = vc.u32 %v728, %v724
        %v731 = vsel %vm730, 1, 0
        %v732 = vadd.s32 %v728, %v724
        %v733 = vadd.s32 %v729, %v731
        %v734 = vadd.s32 %v733, %v723
        %v735 = vadd.s32 %v734, %v725
        %v736 = vmul.u32 %v691, %v682
        %v737 = vadd.s32 %v713, %v732
        %vm738 = vc.u32 %v713, %v732
        %v739 = vadd.s32 %v735, 1
        %v740 = vsel %vm738, %v739, %v735
        %v741 = vadd.s32 %v736, %v740
        %v742 = vadd.s32 %v741, 536870912
        %v743 = vshrl.u32 %v742, 30
        %v744 = vshll.u32 %v743, 30
        %v745 = vsub.s32 %v741, %v744
        %vm746 = vcmp.lt.s32.totalorder %v745, 0
        %v747 = vsub.s32 0, %v745
        %v748 = vsel %vm746, %v747, %v745
        %v749 = vclz %v748
        %v750 = vsub.s32 %v749, 2
        %vm751 = vcmp.gt.s32.totalorder 0, %v750
        %v752 = vsel %vm751, 0, %v750
        %v753 = vsub.s32 32, %v752
        %v754 = vshll.u32 %v745, %v752
        %v755 = vshrl.u32 %v737, %v753
        %v756 = vor.u32 %v754, %v755
        %v757 = vsub.s32 4294967266, %v752
        %v758 = vadd.s32 %v757, 127
        %v759 = vshll.u32 %v758, 23
        %v760 = vor.u32 4788187, %v759
        %v761 = vand.u32 2147483647, %v760
        %v763 = vcvt.s32.f32 %v756
        %v764 = vmul.f32 %v763, %v761
        %v765 = vxor.u32 %v764, 2147483648
        %v766 = vsel %vm645, %v765, %v764
        %v767 = vsub.s32 4, %v743
        %v768 = vsel %vm645, %v767, %v743
        %v769 = vsel %vm644, %v333, %v766
        %v770 = vsel %vm644, 0, %v768
        %v771 = vmul.f32 %v769, %v769
        %v772 = vmul.f32 %v771, -0.001358992
        %v773 = vadd.f32 %v772, 0.041655596
        %v774 = vmul.f32 %v771, %v773
        %v775 = vadd.f32 %v774, -0.4999988
        %v776 = vmul.f32 %v771, %v775
        %v777 = vadd.f32 1.0, %v776
        %v778 = vmul.f32 %v769, %v769
        %v779 = vmul.f32 %v778, -0.00019511016
        %v780 = vadd.f32 %v779, 0.008332121
        %v781 = vmul.f32 %v778, %v780
        %v782 = vadd.f32 %v781, -0.16666654
        %v783 = vmul.f32 %v778, %v782
        %v784 = vadd.f32 %v783, 1.0
        %v785 = vmul.f32 %v784, %v769
        %vm786 = vweird.f32 %v333
        %v787 = vadd.s32 %v770, 3
        %v788 = vand.u32 %v787, 3
        %vm789 = vcmp.lt.s32.totalorder %v788, 2
        %vm790 = vcmp.eq.s32.totalorder %v788, 0
        %v791 = vxor.u32 %v785, 2147483648
        %v792 = vsel %vm790, %v777, %v791
        %vm793 = vcmp.eq.s32.totalorder %v788, 2
        %v794 = vxor.u32 %v777, 2147483648
        %v795 = vsel %vm793, %v794, %v785
        %v796 = vsel %vm789, %v792, %v795
        %v797 = vsel %vm786, nan, %v796
        %v798 = vand.u32 2147483647, %v334
        %vm799 = vcmp.le.f32.partialorder %v798, 0.7853982
        %vm800 = vcmp.lt.s32.totalorder %v334, 0
        %v801 = vand.u32 %v334, 2139095040
        %v802 = vshrl.u32 %v801, 23
        %v803 = vsub.s32 %v802, 127
        %v804 = vand.u32 2147483647, %v334
        %v805 = vand.u32 %v804, 8388607
        %v806 = vor.u32 %v805, 8388608
        %v807 = vsub.s32 0, %v806
        %v808 = vadd.s32 %v803, 1
        %vm809 = vcmp.gt.s32.totalorder %v808, 0
        %v810 = vsel %vm809, %v808, 0
        %v811 = vshrl.u32 %v810, 5
        %v812 = vand.u32 %v810, 31
        %v813 = vsub.s32 32, %v812
        %v814 = vshrl.u32 683565275, %v813
        %v815 = vshll.u32 683565275, %v812
        %v816 = vshrl.u32 2475754826, %v813
        %v817 = vor.u32 %v815, %v816
        %v818 = vshll.u32 2475754826, %v812
        %v819 = vshrl.u32 2131351028, %v813
        %v820 = vor.u32 %v818, %v819
        %v821 = vshll.u32 2131351028, %v812
        %v822 = vshrl.u32 2102212464, %v813
        %v823 = vor.u32 %v821, %v822
        %v824 = vshll.u32 2102212464, %v812
        %v825 = vshrl.u32 920167782, %v813
        %v826 = vor.u32 %v824, %v825
        %v827 = vshll.u32 920167782, %v812
        %v828 = vshrl.u32 1326507024, %v813
        %v829 = vor.u32 %v827, %v828
        %vm830 = vcmp.lt.s32.totalorder %v811, 1
        %vm831 = vcmp.lt.s32.totalorder %v811, 2
        %vm832 = vcmp.lt.s32.totalorder %v811, 3
        %vm833 = vcmp.lt.s32.totalorder %v811, 4
        %v834 = vsel %vm830, %v814, %v817
        %v835 = vsel %vm833, %v823, 2102212464
        %v836 = vsel %vm832, %v820, %v835
        %v837 = vsel %vm831, %v834, %v836
        %v838 = vsel %vm830, %v817, %v820
        %v839 = vsel %vm833, %v826, 920167782
        %v840 = vsel %vm832, %v823, %v839
        %v841 = vsel %vm831, %v838, %v840
        %v842 = vsel %vm830, %v820, %v823
        %v843 = vsel %vm833, %v829, 1326507024
        %v844 = vsel %vm832, %v826, %v843
        %v845 = vsel %vm831, %v842, %v844
        %v846 = vshll.u32 %v806, 8
        %v847 = vand.u32 %v846, 65535
        %v848 = vshrl.u32 %v846, 16
        %v849 = vand.u32 %v845, 65535
        %v850 = vshrl.u32 %v845, 16
        %v851 = vmul.u32 %v847, %v849
        %v852 = vmul.u32 %v847, %v850
        %v853 = vmul.u32 %v848, %v849
        %v854 = vmul.u32 %v848, %v850
        %v855 = vshll.u32 %v852, 16
        %v856 = vshrl.u32 %v852, 16
        %v857 = vshll.u32 %v853, 16
        %v858 = vshrl.u32 %v853, 16
        %vm859 = vc.u32 %v851, %v855
        %v860 = vsel %vm859, 1, 0
        %v861 = vadd.s32 %v851, %v855
        %v862 = vadd.s32 %v854, %v860
        %vm863 = vc.u32 %v861, %v857
        %v864 = vsel %vm863, 1, 0
        %v865 = vadd.s32 %v861, %v857
        %v866 = vadd.s32 %v862, %v864
        %v867 = vadd.s32 %v866, %v856
        %v868 = vadd.s32 %v867, %v858
        %v869 = vand.u32 %v846, 65535
        %v870 = vshrl.u32 %v846, 16
        %v871 = vand.u32 %v841, 65535
        %v872 = vshrl.u32 %v841, 16
        %v873 = vmul.u32 %v869, %v871
        %v874 = vmul.u32 %v869, %v872
        %v875 = vmul.u32 %v870, %v871
        %v876 = vmul.u32 %v870, %v872
        %v877 = vshll.u32 %v874, 16
        %v878 = vshrl.u32 %v874, 16
        %v879 = vshll.u32 %v875, 16
        %v880 = vshrl.u32 %v875, 16
        %vm881 = vc.u32 %v873, %v877
        %v882 = vsel %vm881, 1, 0
        %v883 = vadd.s32 %v873, %v877
        %v884 = vadd.s32 %v876, %v882
        %vm885 = vc.u32 %v883, %v879
        %v886 = vsel %vm885, 1, 0
        %v887 = vadd.s32 %v883, %v879
        %v888 = vadd.s32 %v884, %v886
        %v889 = vadd.s32 %v888, %v878
        %v890 = vadd.s32 %v889, %v880
        %v891 = vmul.u32 %v846, %v837
        %v892 = vadd.s32 %v868, %v887
        %vm893 = vc.u32 %v868, %v887
        %v894 = vadd.s32 %v890, 1
        %v895 = vsel %vm893, %v894, %v890
        %v896 = vadd.s32 %v891, %v895
        %v897 = vadd.s32 %v896, 536870912
        %v898 = vshrl.u32 %v897, 30
        %v899 = vshll.u32 %v898, 30
        %v900 = vsub.s32 %v896, %v899
        %vm901 = vcmp.lt.s32.totalorder %v900, 0
        %v902 = vsub.s32 0, %v900
        %v903 = vsel %vm901, %v902, %v900
        %v904 = vclz %v903
        %v905 = vsub.s32 %v904, 2
        %vm906 = vcmp.gt.s32.totalorder 0, %v905
        %v907 = vsel %vm906, 0, %v905
        %v908 = vsub.s32 32, %v907
        %v909 = vshll.u32 %v900, %v907
        %v910 = vshrl.u32 %v892, %v908
        %v911 = vor.u32 %v909, %v910
        %v912 = vsub.s32 4294967266, %v907
        %v913 = vadd.s32 %v912, 127
        %v914 = vshll.u32 %v913, 23
        %v915 = vor.u32 4788187, %v914
        %v916 = vand.u32 2147483647, %v915
        %v918 = vcvt.s32.f32 %v911
        %v919 = vmul.f32 %v918, %v916
        %v920 = vxor.u32 %v919, 2147483648
        %v921 = vsel %vm800, %v920, %v919
        %v922 = vsub.s32 4, %v898
        %v923 = vsel %vm800, %v922, %v898
        %v924 = vsel %vm799, %v334, %v921
        %v925 = vsel %vm799, 0, %v923
        %v926 = vmul.f32 %v924, %v924
        %v927 = vmul.f32 %v926, -0.001358992
        %v928 = vadd.f32 %v927, 0.041655596
        %v929 = vmul.f32 %v926, %v928
        %v930 = vadd.f32 %v929, -0.4999988
        %v931 = vmul.f32 %v926, %v930
        %v932 = vadd.f32 1.0, %v931
        %v933 = vmul.f32 %v924, %v924
        %v934 = vmul.f32 %v933, -0.00019511016
        %v935 = vadd.f32 %v934, 0.008332121
        %v936 = vmul.f32 %v933, %v935
        %v937 = vadd.f32 %v936, -0.16666654
        %v938 = vmul.f32 %v933, %v937
        %v939 = vadd.f32 %v938, 1.0
        %v940 = vmul.f32 %v939, %v924
        %vm941 = vweird.f32 %v334
        %v942 = vadd.s32 %v925, 3
        %v943 = vand.u32 %v942, 3
        %vm944 = vcmp.lt.s32.totalorder %v943, 2
        %vm945 = vcmp.eq.s32.totalorder %v943, 0
        %v946 = vxor.u32 %v940, 2147483648
        %v947 = vsel %vm945, %v932, %v946
        %vm948 = vcmp.eq.s32.totalorder %v943, 2
        %v949 = vxor.u32 %v932, 2147483648
        %v950 = vsel %vm948, %v949, %v940
        %v951 = vsel %vm944, %v947, %v950
        %v952 = vsel %vm941, nan, %v951
        %v953 = vld [vmem:[%s276] sm:$0xf]
        %v954 = vand.u32 2147483647, %v953
        %vm955 = vcmp.le.f32.partialorder %v954, 0.7853982
        %vm956 = vcmp.lt.s32.totalorder %v953, 0
        %v957 = vand.u32 %v953, 2139095040
        %v958 = vshrl.u32 %v957, 23
        %v959 = vsub.s32 %v958, 127
        %v960 = vand.u32 2147483647, %v953
        %v961 = vand.u32 %v960, 8388607
        %v962 = vor.u32 %v961, 8388608
        %v963 = vsub.s32 0, %v962
        %v964 = vadd.s32 %v959, 1
        %vm965 = vcmp.gt.s32.totalorder %v964, 0
        %v966 = vsel %vm965, %v964, 0
        %v967 = vshrl.u32 %v966, 5
        %v968 = vand.u32 %v966, 31
        %v969 = vsub.s32 32, %v968
        %v970 = vshrl.u32 683565275, %v969
        %v971 = vshll.u32 683565275, %v968
        %v972 = vshrl.u32 2475754826, %v969
        %v973 = vor.u32 %v971, %v972
        %v974 = vshll.u32 2475754826, %v968
        %v975 = vshrl.u32 2131351028, %v969
        %v976 = vor.u32 %v974, %v975
        %v977 = vshll.u32 2131351028, %v968
        %v978 = vshrl.u32 2102212464, %v969
        %v979 = vor.u32 %v977, %v978
        %v980 = vshll.u32 2102212464, %v968
        %v981 = vshrl.u32 920167782, %v969
        %v982 = vor.u32 %v980, %v981
        %v983 = vshll.u32 920167782, %v968
        %v984 = vshrl.u32 1326507024, %v969
        %v985 = vor.u32 %v983, %v984
        %vm986 = vcmp.lt.s32.totalorder %v967, 1
        %vm987 = vcmp.lt.s32.totalorder %v967, 2
        %vm988 = vcmp.lt.s32.totalorder %v967, 3
        %vm989 = vcmp.lt.s32.totalorder %v967, 4
        %v990 = vsel %vm986, %v970, %v973
        %v991 = vsel %vm989, %v979, 2102212464
        %v992 = vsel %vm988, %v976, %v991
        %v993 = vsel %vm987, %v990, %v992
        %v994 = vsel %vm986, %v973, %v976
        %v995 = vsel %vm989, %v982, 920167782
        %v996 = vsel %vm988, %v979, %v995
        %v997 = vsel %vm987, %v994, %v996
        %v998 = vsel %vm986, %v976, %v979
        %v999 = vsel %vm989, %v985, 1326507024
        %v1000 = vsel %vm988, %v982, %v999
        %v1001 = vsel %vm987, %v998, %v1000
        %v1002 = vshll.u32 %v962, 8
        %v1003 = vand.u32 %v1002, 65535
        %v1004 = vshrl.u32 %v1002, 16
        %v1005 = vand.u32 %v1001, 65535
        %v1006 = vshrl.u32 %v1001, 16
        %v1007 = vmul.u32 %v1003, %v1005
        %v1008 = vmul.u32 %v1003, %v1006
        %v1009 = vmul.u32 %v1004, %v1005
        %v1010 = vmul.u32 %v1004, %v1006
        %v1011 = vshll.u32 %v1008, 16
        %v1012 = vshrl.u32 %v1008, 16
        %v1013 = vshll.u32 %v1009, 16
        %v1014 = vshrl.u32 %v1009, 16
        %vm1015 = vc.u32 %v1007, %v1011
        %v1016 = vsel %vm1015, 1, 0
        %v1017 = vadd.s32 %v1007, %v1011
        %v1018 = vadd.s32 %v1010, %v1016
        %vm1019 = vc.u32 %v1017, %v1013
        %v1020 = vsel %vm1019, 1, 0
        %v1021 = vadd.s32 %v1017, %v1013
        %v1022 = vadd.s32 %v1018, %v1020
        %v1023 = vadd.s32 %v1022, %v1012
        %v1024 = vadd.s32 %v1023, %v1014
        %v1025 = vand.u32 %v1002, 65535
        %v1026 = vshrl.u32 %v1002, 16
        %v1027 = vand.u32 %v997, 65535
        %v1028 = vshrl.u32 %v997, 16
        %v1029 = vmul.u32 %v1025, %v1027
        %v1030 = vmul.u32 %v1025, %v1028
        %v1031 = vmul.u32 %v1026, %v1027
        %v1032 = vmul.u32 %v1026, %v1028
        %v1033 = vshll.u32 %v1030, 16
        %v1034 = vshrl.u32 %v1030, 16
        %v1035 = vshll.u32 %v1031, 16
        %v1036 = vshrl.u32 %v1031, 16
        %vm1037 = vc.u32 %v1029, %v1033
        %v1038 = vsel %vm1037, 1, 0
        %v1039 = vadd.s32 %v1029, %v1033
        %v1040 = vadd.s32 %v1032, %v1038
        %vm1041 = vc.u32 %v1039, %v1035
        %v1042 = vsel %vm1041, 1, 0
        %v1043 = vadd.s32 %v1039, %v1035
        %v1044 = vadd.s32 %v1040, %v1042
        %v1045 = vadd.s32 %v1044, %v1034
        %v1046 = vadd.s32 %v1045, %v1036
        %v1047 = vmul.u32 %v1002, %v993
        %v1048 = vadd.s32 %v1024, %v1043
        %vm1049 = vc.u32 %v1024, %v1043
        %v1050 = vadd.s32 %v1046, 1
        %v1051 = vsel %vm1049, %v1050, %v1046
        %v1052 = vadd.s32 %v1047, %v1051
        %v1053 = vadd.s32 %v1052, 536870912
        %v1054 = vshrl.u32 %v1053, 30
        %v1055 = vshll.u32 %v1054, 30
        %v1056 = vsub.s32 %v1052, %v1055
        %vm1057 = vcmp.lt.s32.totalorder %v1056, 0
        %v1058 = vsub.s32 0, %v1056
        %v1059 = vsel %vm1057, %v1058, %v1056
        %v1060 = vclz %v1059
        %v1061 = vsub.s32 %v1060, 2
        %vm1062 = vcmp.gt.s32.totalorder 0, %v1061
        %v1063 = vsel %vm1062, 0, %v1061
        %v1064 = vsub.s32 32, %v1063
        %v1065 = vshll.u32 %v1056, %v1063
        %v1066 = vshrl.u32 %v1048, %v1064
        %v1067 = vor.u32 %v1065, %v1066
        %v1068 = vsub.s32 4294967266, %v1063
        %v1069 = vadd.s32 %v1068, 127
        %v1070 = vshll.u32 %v1069, 23
        %v1071 = vor.u32 4788187, %v1070
        %v1072 = vand.u32 2147483647, %v1071
        %v1074 = vcvt.s32.f32 %v1067
        %v1075 = vmul.f32 %v1074, %v1072
        %v1076 = vxor.u32 %v1075, 2147483648
        %v1077 = vsel %vm956, %v1076, %v1075
        %v1078 = vsub.s32 4, %v1054
        %v1079 = vsel %vm956, %v1078, %v1054
        %v1080 = vsel %vm955, %v953, %v1077
        %v1081 = vsel %vm955, 0, %v1079
        %v1082 = vmul.f32 %v1080, %v1080
        %v1083 = vmul.f32 %v1082, -0.001358992
        %v1084 = vadd.f32 %v1083, 0.041655596
        %v1085 = vmul.f32 %v1082, %v1084
        %v1086 = vadd.f32 %v1085, -0.4999988
        %v1087 = vmul.f32 %v1082, %v1086
        %v1088 = vadd.f32 1.0, %v1087
        %v1089 = vmul.f32 %v1080, %v1080
        %v1090 = vmul.f32 %v1089, -0.00019511016
        %v1091 = vadd.f32 %v1090, 0.008332121
        %v1092 = vmul.f32 %v1089, %v1091
        %v1093 = vadd.f32 %v1092, -0.16666654
        %v1094 = vmul.f32 %v1089, %v1093
        %v1095 = vadd.f32 %v1094, 1.0
        %v1096 = vmul.f32 %v1095, %v1080
        %vm1097 = vweird.f32 %v953
        %v1098 = vand.u32 %v1081, 3
        %vm1099 = vcmp.lt.s32.totalorder %v1098, 2
        %vm1100 = vcmp.eq.s32.totalorder %v1098, 0
        %v1101 = vxor.u32 %v1096, 2147483648
        %v1102 = vsel %vm1100, %v1088, %v1101
        %vm1103 = vcmp.eq.s32.totalorder %v1098, 2
        %v1104 = vxor.u32 %v1088, 2147483648
        %v1105 = vsel %vm1103, %v1104, %v1096
        %v1106 = vsel %vm1099, %v1102, %v1105
        %v1107 = vsel %vm1097, nan, %v1106
        %v1108 = vand.u32 2147483647, %v953
        %vm1109 = vcmp.le.f32.partialorder %v1108, 0.7853982
        %vm1110 = vcmp.lt.s32.totalorder %v953, 0
        %v1111 = vand.u32 %v953, 2139095040
        %v1112 = vshrl.u32 %v1111, 23
        %v1113 = vsub.s32 %v1112, 127
        %v1114 = vand.u32 2147483647, %v953
        %v1115 = vand.u32 %v1114, 8388607
        %v1116 = vor.u32 %v1115, 8388608
        %v1117 = vsub.s32 0, %v1116
        %v1118 = vadd.s32 %v1113, 1
        %vm1119 = vcmp.gt.s32.totalorder %v1118, 0
        %v1120 = vsel %vm1119, %v1118, 0
        %v1121 = vshrl.u32 %v1120, 5
        %v1122 = vand.u32 %v1120, 31
        %v1123 = vsub.s32 32, %v1122
        %v1124 = vshrl.u32 683565275, %v1123
        %v1125 = vshll.u32 683565275, %v1122
        %v1126 = vshrl.u32 2475754826, %v1123
        %v1127 = vor.u32 %v1125, %v1126
        %v1128 = vshll.u32 2475754826, %v1122
        %v1129 = vshrl.u32 2131351028, %v1123
        %v1130 = vor.u32 %v1128, %v1129
        %v1131 = vshll.u32 2131351028, %v1122
        %v1132 = vshrl.u32 2102212464, %v1123
        %v1133 = vor.u32 %v1131, %v1132
        %v1134 = vshll.u32 2102212464, %v1122
        %v1135 = vshrl.u32 920167782, %v1123
        %v1136 = vor.u32 %v1134, %v1135
        %v1137 = vshll.u32 920167782, %v1122
        %v1138 = vshrl.u32 1326507024, %v1123
        %v1139 = vor.u32 %v1137, %v1138
        %vm1140 = vcmp.lt.s32.totalorder %v1121, 1
        %vm1141 = vcmp.lt.s32.totalorder %v1121, 2
        %vm1142 = vcmp.lt.s32.totalorder %v1121, 3
        %vm1143 = vcmp.lt.s32.totalorder %v1121, 4
        %v1144 = vsel %vm1140, %v1124, %v1127
        %v1145 = vsel %vm1143, %v1133, 2102212464
        %v1146 = vsel %vm1142, %v1130, %v1145
        %v1147 = vsel %vm1141, %v1144, %v1146
        %v1148 = vsel %vm1140, %v1127, %v1130
        %v1149 = vsel %vm1143, %v1136, 920167782
        %v1150 = vsel %vm1142, %v1133, %v1149
        %v1151 = vsel %vm1141, %v1148, %v1150
        %v1152 = vsel %vm1140, %v1130, %v1133
        %v1153 = vsel %vm1143, %v1139, 1326507024
        %v1154 = vsel %vm1142, %v1136, %v1153
        %v1155 = vsel %vm1141, %v1152, %v1154
        %v1156 = vshll.u32 %v1116, 8
        %v1157 = vand.u32 %v1156, 65535
        %v1158 = vshrl.u32 %v1156, 16
        %v1159 = vand.u32 %v1155, 65535
        %v1160 = vshrl.u32 %v1155, 16
        %v1161 = vmul.u32 %v1157, %v1159
        %v1162 = vmul.u32 %v1157, %v1160
        %v1163 = vmul.u32 %v1158, %v1159
        %v1164 = vmul.u32 %v1158, %v1160
        %v1165 = vshll.u32 %v1162, 16
        %v1166 = vshrl.u32 %v1162, 16
        %v1167 = vshll.u32 %v1163, 16
        %v1168 = vshrl.u32 %v1163, 16
        %vm1169 = vc.u32 %v1161, %v1165
        %v1170 = vsel %vm1169, 1, 0
        %v1171 = vadd.s32 %v1161, %v1165
        %v1172 = vadd.s32 %v1164, %v1170
        %vm1173 = vc.u32 %v1171, %v1167
        %v1174 = vsel %vm1173, 1, 0
        %v1175 = vadd.s32 %v1171, %v1167
        %v1176 = vadd.s32 %v1172, %v1174
        %v1177 = vadd.s32 %v1176, %v1166
        %v1178 = vadd.s32 %v1177, %v1168
        %v1179 = vand.u32 %v1156, 65535
        %v1180 = vshrl.u32 %v1156, 16
        %v1181 = vand.u32 %v1151, 65535
        %v1182 = vshrl.u32 %v1151, 16
        %v1183 = vmul.u32 %v1179, %v1181
        %v1184 = vmul.u32 %v1179, %v1182
        %v1185 = vmul.u32 %v1180, %v1181
        %v1186 = vmul.u32 %v1180, %v1182
        %v1187 = vshll.u32 %v1184, 16
        %v1188 = vshrl.u32 %v1184, 16
        %v1189 = vshll.u32 %v1185, 16
        %v1190 = vshrl.u32 %v1185, 16
        %vm1191 = vc.u32 %v1183, %v1187
        %v1192 = vsel %vm1191, 1, 0
        %v1193 = vadd.s32 %v1183, %v1187
        %v1194 = vadd.s32 %v1186, %v1192
        %vm1195 = vc.u32 %v1193, %v1189
        %v1196 = vsel %vm1195, 1, 0
        %v1197 = vadd.s32 %v1193, %v1189
        %v1198 = vadd.s32 %v1194, %v1196
        %v1199 = vadd.s32 %v1198, %v1188
        %v1200 = vadd.s32 %v1199, %v1190
        %v1201 = vmul.u32 %v1156, %v1147
        %v1202 = vadd.s32 %v1178, %v1197
        %vm1203 = vc.u32 %v1178, %v1197
        %v1204 = vadd.s32 %v1200, 1
        %v1205 = vsel %vm1203, %v1204, %v1200
        %v1206 = vadd.s32 %v1201, %v1205
        %v1207 = vadd.s32 %v1206, 536870912
        %v1208 = vshrl.u32 %v1207, 30
        %v1209 = vshll.u32 %v1208, 30
        %v1210 = vsub.s32 %v1206, %v1209
        %vm1211 = vcmp.lt.s32.totalorder %v1210, 0
        %v1212 = vsub.s32 0, %v1210
        %v1213 = vsel %vm1211, %v1212, %v1210
        %v1214 = vclz %v1213
        %v1215 = vsub.s32 %v1214, 2
        %vm1216 = vcmp.gt.s32.totalorder 0, %v1215
        %v1217 = vsel %vm1216, 0, %v1215
        %v1218 = vsub.s32 32, %v1217
        %v1219 = vshll.u32 %v1210, %v1217
        %v1220 = vshrl.u32 %v1202, %v1218
        %v1221 = vor.u32 %v1219, %v1220
        %v1222 = vsub.s32 4294967266, %v1217
        %v1223 = vadd.s32 %v1222, 127
        %v1224 = vshll.u32 %v1223, 23
        %v1225 = vor.u32 4788187, %v1224
        %v1226 = vand.u32 2147483647, %v1225
        %v1228 = vcvt.s32.f32 %v1221
        %v1229 = vmul.f32 %v1228, %v1226
        %v1230 = vxor.u32 %v1229, 2147483648
        %v1231 = vsel %vm1110, %v1230, %v1229
        %v1232 = vsub.s32 4, %v1208
        %v1233 = vsel %vm1110, %v1232, %v1208
        %v1234 = vsel %vm1109, %v953, %v1231
        %v1235 = vsel %vm1109, 0, %v1233
        %v1236 = vmul.f32 %v1234, %v1234
        %v1237 = vmul.f32 %v1236, -0.001358992
        %v1238 = vadd.f32 %v1237, 0.041655596
        %v1239 = vmul.f32 %v1236, %v1238
        %v1240 = vadd.f32 %v1239, -0.4999988
        %v1241 = vmul.f32 %v1236, %v1240
        %v1242 = vadd.f32 1.0, %v1241
        %v1243 = vmul.f32 %v1234, %v1234
        %v1244 = vmul.f32 %v1243, -0.00019511016
        %v1245 = vadd.f32 %v1244, 0.008332121
        %v1246 = vmul.f32 %v1243, %v1245
        %v1247 = vadd.f32 %v1246, -0.16666654
        %v1248 = vmul.f32 %v1243, %v1247
        %v1249 = vadd.f32 %v1248, 1.0
        %v1250 = vmul.f32 %v1249, %v1234
        %vm1251 = vweird.f32 %v953
        %v1252 = vadd.s32 %v1235, 3
        %v1253 = vand.u32 %v1252, 3
        %vm1254 = vcmp.lt.s32.totalorder %v1253, 2
        %vm1255 = vcmp.eq.s32.totalorder %v1253, 0
        %v1256 = vxor.u32 %v1250, 2147483648
        %v1257 = vsel %vm1255, %v1242, %v1256
        %vm1258 = vcmp.eq.s32.totalorder %v1253, 2
        %v1259 = vxor.u32 %v1242, 2147483648
        %v1260 = vsel %vm1258, %v1259, %v1250
        %v1261 = vsel %vm1254, %v1257, %v1260
        %v1262 = vsel %vm1251, nan, %v1261
        %v1264 = vperm.slane %v1107, 0
        %v1265 = vperm.slane %v1107, 2
        %v1270 = vrot.slane %v488, 7
        %v1271 = vrot.slane %v642, 7
        %vm1274 = vcmask 1040384
        %v1275 = vsel %vm1274, %v1264, %v1270
        %v1276 = vsel %vm1274, %v1265, %v1271
        %v1278 = vperm.slane %v1262, 0
        %v1279 = vperm.slane %v1262, 2
        %v1284 = vrot.slane %v797, 7
        %v1285 = vrot.slane %v952, 7
        %v1288 = vsel %vm1274, %v1278, %v1284
        %v1289 = vsel %vm1274, %v1279, %v1285
        %v1290 = vrot.slane %v488, 1
        %v1291 = vrot.slane %v642, 1
        %v1294 = vperm.slane %v1107, 1
        %v1295 = vperm.slane %v1107, 3
        %vm1298 = vcmask 1046528
        %v1299 = vsel %vm1298, %v1290, %v1294
        %v1300 = vsel %vm1298, %v1291, %v1295
        %v1301 = vrot.slane %v797, 1
        %v1302 = vrot.slane %v952, 1
        %v1305 = vperm.slane %v1262, 1
        %v1306 = vperm.slane %v1262, 3
        %v1309 = vsel %vm1298, %v1301, %v1305
        %v1310 = vsel %vm1298, %v1302, %v1306
        %v1311 = vld [vmem:[%s296] sm:$0xff]
        %v1312 = vld [vmem:[%s296 + $0x8] sm:$0xff]
        %1313 = vrot.lane.b32.xlu0 %v1275, 17
        %v1314 = vpop.permute.xlu0 %1313
        %1315 = vrot.lane.b32.xlu0 %v1276, 17
        %v1316 = vpop.permute.xlu0 %1315
        %v1317 = vlaneseq
        %v1318 = vand.u32 %v1317, 127
        %vm1319 = vcmp.lt.s32.totalorder %v1318, 17
        %v1320 = vsel %vm1319, %v1314, %v1316
        %v1321 = vsel %vm1319, %v1316, %v1314
        %1322 = vrot.lane.b32.xlu0 %v1288, 17
        %v1323 = vpop.permute.xlu0 %1322
        %1324 = vrot.lane.b32.xlu0 %v1289, 17
        %v1325 = vpop.permute.xlu0 %1324
        %v1326 = vsel %vm1319, %v1323, %v1325
        %v1327 = vsel %vm1319, %v1325, %v1323
        %v1328 = vmul.f32 %v1327, %v488
        %v1329 = vmul.f32 %v1326, %v642
        %v1330 = vmul.f32 %v1321, %v797
        %v1331 = vmul.f32 %v1320, %v952
        %v1332 = vsub.f32 %v1328, %v1330
        %v1333 = vsub.f32 %v1329, %v1331
        %s1334 = sld [smem:[#allocation2]]
        %v1335 = vstv %s1334
        %v1336 = vmul.f32 %v1335, %v1332
        %v1337 = vmul.f32 %v1335, %v1333
        %v1338 = vadd.f32 %v1336, 0.0
        %v1339 = vadd.f32 %v1337, 0.0
        %1340 = vrot.lane.b32.xlu0 %v1275, 16
        %v1341 = vpop.permute.xlu0 %1340
        %1342 = vrot.lane.b32.xlu0 %v1276, 16
        %v1343 = vpop.permute.xlu0 %1342
        %vm1344 = vcmp.lt.s32.totalorder %v1318, 16
        %v1345 = vsel %vm1344, %v1341, %v1343
        %v1346 = vsel %vm1344, %v1343, %v1341
        %1347 = vrot.lane.b32.xlu0 %v1288, 16
        %v1348 = vpop.permute.xlu0 %1347
        %1349 = vrot.lane.b32.xlu0 %v1289, 16
        %v1350 = vpop.permute.xlu0 %1349
        %v1351 = vsel %vm1344, %v1348, %v1350
        %v1352 = vsel %vm1344, %v1350, %v1348
        %v1353 = vmul.f32 %v1352, %v488
        %v1354 = vmul.f32 %v1351, %v642
        %v1355 = vmul.f32 %v1346, %v797
        %v1356 = vmul.f32 %v1345, %v952
        %v1357 = vsub.f32 %v1353, %v1355
        %v1358 = vsub.f32 %v1354, %v1356
        %s1359 = sld [smem:[#allocation2 + $0x1]]
        %v1360 = vstv %s1359
        %v1361 = vmul.f32 %v1360, %v1357
        %v1362 = vmul.f32 %v1360, %v1358
        %v1363 = vadd.f32 %v1338, %v1361
        %v1364 = vadd.f32 %v1339, %v1362
        %1365 = vrot.lane.b32.xlu0 %v1275, 15
        %v1366 = vpop.permute.xlu0 %1365
        %1367 = vrot.lane.b32.xlu0 %v1276, 15
        %v1368 = vpop.permute.xlu0 %1367
        %vm1369 = vcmp.lt.s32.totalorder %v1318, 15
        %v1370 = vsel %vm1369, %v1366, %v1368
        %v1371 = vsel %vm1369, %v1368, %v1366
        %1372 = vrot.lane.b32.xlu0 %v1288, 15
        %v1373 = vpop.permute.xlu0 %1372
        %1374 = vrot.lane.b32.xlu0 %v1289, 15
        %v1375 = vpop.permute.xlu0 %1374
        %v1376 = vsel %vm1369, %v1373, %v1375
        %v1377 = vsel %vm1369, %v1375, %v1373
        %v1378 = vmul.f32 %v1377, %v488
        %v1379 = vmul.f32 %v1376, %v642
        %v1380 = vmul.f32 %v1371, %v797
        %v1381 = vmul.f32 %v1370, %v952
        %v1382 = vsub.f32 %v1378, %v1380
        %v1383 = vsub.f32 %v1379, %v1381
        %s1384 = sld [smem:[#allocation2 + $0x2]]
        %v1385 = vstv %s1384
        %v1386 = vmul.f32 %v1385, %v1382
        %v1387 = vmul.f32 %v1385, %v1383
        %v1388 = vadd.f32 %v1363, %v1386
        %v1389 = vadd.f32 %v1364, %v1387
        %1390 = vrot.lane.b32.xlu0 %v1275, 1
        %v1391 = vpop.permute.xlu0 %1390
        %1392 = vrot.lane.b32.xlu0 %v1276, 1
        %v1393 = vpop.permute.xlu0 %1392
        %vm1394 = vcmp.lt.s32.totalorder %v1318, 1
        %v1395 = vsel %vm1394, %v1391, %v1393
        %v1396 = vsel %vm1394, %v1393, %v1391
        %1397 = vrot.lane.b32.xlu0 %v1288, 1
        %v1398 = vpop.permute.xlu0 %1397
        %1399 = vrot.lane.b32.xlu0 %v1289, 1
        %v1400 = vpop.permute.xlu0 %1399
        %v1401 = vsel %vm1394, %v1398, %v1400
        %v1402 = vsel %vm1394, %v1400, %v1398
        %v1403 = vmul.f32 %v1402, %v488
        %v1404 = vmul.f32 %v1401, %v642
        %v1405 = vmul.f32 %v1396, %v797
        %v1406 = vmul.f32 %v1395, %v952
        %v1407 = vsub.f32 %v1403, %v1405
        %v1408 = vsub.f32 %v1404, %v1406
        %s1409 = sld [smem:[#allocation2 + $0x3]]
        %v1410 = vstv %s1409
        %v1411 = vmul.f32 %v1410, %v1407
        %v1412 = vmul.f32 %v1410, %v1408
        %v1413 = vadd.f32 %v1388, %v1411
        %v1414 = vadd.f32 %v1389, %v1412
        %v1415 = vmul.f32 %v1288, %v488
        %v1416 = vmul.f32 %v1289, %v642
        %v1417 = vmul.f32 %v1275, %v797
        %v1418 = vmul.f32 %v1276, %v952
        %v1419 = vsub.f32 %v1415, %v1417
        %v1420 = vsub.f32 %v1416, %v1418
        %s1421 = sld [smem:[#allocation2 + $0x4]]
        %v1422 = vstv %s1421
        %v1423 = vmul.f32 %v1422, %v1419
        %v1424 = vmul.f32 %v1422, %v1420
        %v1425 = vadd.f32 %v1413, %v1423
        %v1426 = vadd.f32 %v1414, %v1424
        %1427 = vrot.lane.b32.xlu0 %v1275, 127
        %v1428 = vpop.permute.xlu0 %1427
        %1429 = vrot.lane.b32.xlu0 %v1276, 127
        %v1430 = vpop.permute.xlu0 %1429
        %vm1431 = vcmp.lt.s32.totalorder %v1318, 127
        %v1432 = vsel %vm1431, %v1428, %v1430
        %v1433 = vsel %vm1431, %v1430, %v1428
        %1434 = vrot.lane.b32.xlu0 %v1288, 127
        %v1435 = vpop.permute.xlu0 %1434
        %1436 = vrot.lane.b32.xlu0 %v1289, 127
        %v1437 = vpop.permute.xlu0 %1436
        %v1438 = vsel %vm1431, %v1435, %v1437
        %v1439 = vsel %vm1431, %v1437, %v1435
        %v1440 = vmul.f32 %v1438, %v488
        %v1441 = vmul.f32 %v1439, %v642
        %v1442 = vmul.f32 %v1432, %v797
        %v1443 = vmul.f32 %v1433, %v952
        %v1444 = vsub.f32 %v1440, %v1442
        %v1445 = vsub.f32 %v1441, %v1443
        %s1446 = sld [smem:[#allocation2 + $0x5]]
        %v1447 = vstv %s1446
        %v1448 = vmul.f32 %v1447, %v1444
        %v1449 = vmul.f32 %v1447, %v1445
        %v1450 = vadd.f32 %v1425, %v1448
        %v1451 = vadd.f32 %v1426, %v1449
        %1452 = vrot.lane.b32.xlu0 %v1275, 113
        %v1453 = vpop.permute.xlu0 %1452
        %1454 = vrot.lane.b32.xlu0 %v1276, 113
        %v1455 = vpop.permute.xlu0 %1454
        %vm1456 = vcmp.lt.s32.totalorder %v1318, 113
        %v1457 = vsel %vm1456, %v1453, %v1455
        %v1458 = vsel %vm1456, %v1455, %v1453
        %1459 = vrot.lane.b32.xlu0 %v1288, 113
        %v1460 = vpop.permute.xlu0 %1459
        %1461 = vrot.lane.b32.xlu0 %v1289, 113
        %v1462 = vpop.permute.xlu0 %1461
        %v1463 = vsel %vm1456, %v1460, %v1462
        %v1464 = vsel %vm1456, %v1462, %v1460
        %v1465 = vmul.f32 %v1463, %v488
        %v1466 = vmul.f32 %v1464, %v642
        %v1467 = vmul.f32 %v1457, %v797
        %v1468 = vmul.f32 %v1458, %v952
        %v1469 = vsub.f32 %v1465, %v1467
        %v1470 = vsub.f32 %v1466, %v1468
        %s1471 = sld [smem:[#allocation2 + $0x6]]
        %v1472 = vstv %s1471
        %v1473 = vmul.f32 %v1472, %v1469
        %v1474 = vmul.f32 %v1472, %v1470
        %v1475 = vadd.f32 %v1450, %v1473
        %v1476 = vadd.f32 %v1451, %v1474
        %1477 = vrot.lane.b32.xlu0 %v1275, 112
        %v1478 = vpop.permute.xlu0 %1477
        %1479 = vrot.lane.b32.xlu0 %v1276, 112
        %v1480 = vpop.permute.xlu0 %1479
        %vm1481 = vcmp.lt.s32.totalorder %v1318, 112
        %v1482 = vsel %vm1481, %v1478, %v1480
        %v1483 = vsel %vm1481, %v1480, %v1478
        %1484 = vrot.lane.b32.xlu0 %v1288, 112
        %v1485 = vpop.permute.xlu0 %1484
        %1486 = vrot.lane.b32.xlu0 %v1289, 112
        %v1487 = vpop.permute.xlu0 %1486
        %v1488 = vsel %vm1481, %v1485, %v1487
        %v1489 = vsel %vm1481, %v1487, %v1485
        %v1490 = vmul.f32 %v1488, %v488
        %v1491 = vmul.f32 %v1489, %v642
        %v1492 = vmul.f32 %v1482, %v797
        %v1493 = vmul.f32 %v1483, %v952
        %v1494 = vsub.f32 %v1490, %v1492
        %v1495 = vsub.f32 %v1491, %v1493
        %s1496 = sld [smem:[#allocation2 + $0x7]]
        %v1497 = vstv %s1496
        %v1498 = vmul.f32 %v1497, %v1494
        %v1499 = vmul.f32 %v1497, %v1495
        %v1500 = vadd.f32 %v1475, %v1498
        %v1501 = vadd.f32 %v1476, %v1499
        %1502 = vrot.lane.b32.xlu0 %v1275, 111
        %v1503 = vpop.permute.xlu0 %1502
        %1504 = vrot.lane.b32.xlu0 %v1276, 111
        %v1505 = vpop.permute.xlu0 %1504
        %vm1506 = vcmp.lt.s32.totalorder %v1318, 111
        %v1507 = vsel %vm1506, %v1503, %v1505
        %v1508 = vsel %vm1506, %v1505, %v1503
        %1509 = vrot.lane.b32.xlu0 %v1288, 111
        %v1510 = vpop.permute.xlu0 %1509
        %1511 = vrot.lane.b32.xlu0 %v1289, 111
        %v1512 = vpop.permute.xlu0 %1511
        %v1513 = vsel %vm1506, %v1510, %v1512
        %v1514 = vsel %vm1506, %v1512, %v1510
        %v1515 = vmul.f32 %v1513, %v488
        %v1516 = vmul.f32 %v1514, %v642
        %v1517 = vmul.f32 %v1507, %v797
        %v1518 = vmul.f32 %v1508, %v952
        %v1519 = vsub.f32 %v1515, %v1517
        %v1520 = vsub.f32 %v1516, %v1518
        %s1521 = sld [smem:[#allocation2 + $0x8]]
        %v1522 = vstv %s1521
        %v1523 = vmul.f32 %v1522, %v1519
        %v1524 = vmul.f32 %v1522, %v1520
        %v1525 = vadd.f32 %v1500, %v1523
        %v1526 = vadd.f32 %v1501, %v1524
        %1527 = vrot.lane.b32.xlu0 %v488, 17
        %v1528 = vpop.permute.xlu0 %1527
        %1529 = vrot.lane.b32.xlu0 %v642, 17
        %v1530 = vpop.permute.xlu0 %1529
        %v1531 = vsel %vm1319, %v1528, %v1530
        %v1532 = vsel %vm1319, %v1530, %v1528
        %1533 = vrot.lane.b32.xlu0 %v797, 17
        %v1534 = vpop.permute.xlu0 %1533
        %1535 = vrot.lane.b32.xlu0 %v952, 17
        %v1536 = vpop.permute.xlu0 %1535
        %v1537 = vsel %vm1319, %v1534, %v1536
        %v1538 = vsel %vm1319, %v1536, %v1534
        %v1539 = vmul.f32 %v1538, %v488
        %v1540 = vmul.f32 %v1537, %v642
        %v1541 = vmul.f32 %v1532, %v797
        %v1542 = vmul.f32 %v1531, %v952
        %v1543 = vsub.f32 %v1539, %v1541
        %v1544 = vsub.f32 %v1540, %v1542
        %s1545 = sld [smem:[#allocation2 + $0x9]]
        %v1546 = vstv %s1545
        %v1547 = vmul.f32 %v1546, %v1543
        %v1548 = vmul.f32 %v1546, %v1544
        %v1549 = vadd.f32 %v1525, %v1547
        %v1550 = vadd.f32 %v1526, %v1548
        %1551 = vrot.lane.b32.xlu0 %v488, 16
        %v1552 = vpop.permute.xlu0 %1551
        %1553 = vrot.lane.b32.xlu0 %v642, 16
        %v1554 = vpop.permute.xlu0 %1553
        %v1555 = vsel %vm1344, %v1552, %v1554
        %v1556 = vsel %vm1344, %v1554, %v1552
        %1557 = vrot.lane.b32.xlu0 %v797, 16
        %v1558 = vpop.permute.xlu0 %1557
        %1559 = vrot.lane.b32.xlu0 %v952, 16
        %v1560 = vpop.permute.xlu0 %1559
        %v1561 = vsel %vm1344, %v1558, %v1560
        %v1562 = vsel %vm1344, %v1560, %v1558
        %v1563 = vmul.f32 %v1562, %v488
        %v1564 = vmul.f32 %v1561, %v642
        %v1565 = vmul.f32 %v1556, %v797
        %v1566 = vmul.f32 %v1555, %v952
        %v1567 = vsub.f32 %v1563, %v1565
        %v1568 = vsub.f32 %v1564, %v1566
        %s1569 = sld [smem:[#allocation2 + $0xa]]
        %v1570 = vstv %s1569
        %v1571 = vmul.f32 %v1570, %v1567
        %v1572 = vmul.f32 %v1570, %v1568
        %v1573 = vadd.f32 %v1549, %v1571
        %v1574 = vadd.f32 %v1550, %v1572
        %1575 = vrot.lane.b32.xlu0 %v488, 15
        %v1576 = vpop.permute.xlu0 %1575
        %1577 = vrot.lane.b32.xlu0 %v642, 15
        %v1578 = vpop.permute.xlu0 %1577
        %v1579 = vsel %vm1369, %v1576, %v1578
        %v1580 = vsel %vm1369, %v1578, %v1576
        %1581 = vrot.lane.b32.xlu0 %v797, 15
        %v1582 = vpop.permute.xlu0 %1581
        %1583 = vrot.lane.b32.xlu0 %v952, 15
        %v1584 = vpop.permute.xlu0 %1583
        %v1585 = vsel %vm1369, %v1582, %v1584
        %v1586 = vsel %vm1369, %v1584, %v1582
        %v1587 = vmul.f32 %v1586, %v488
        %v1588 = vmul.f32 %v1585, %v642
        %v1589 = vmul.f32 %v1580, %v797
        %v1590 = vmul.f32 %v1579, %v952
        %v1591 = vsub.f32 %v1587, %v1589
        %v1592 = vsub.f32 %v1588, %v1590
        %s1593 = sld [smem:[#allocation2 + $0xb]]
        %v1594 = vstv %s1593
        %v1595 = vmul.f32 %v1594, %v1591
        %v1596 = vmul.f32 %v1594, %v1592
        %v1597 = vadd.f32 %v1573, %v1595
        %v1598 = vadd.f32 %v1574, %v1596
        %1599 = vrot.lane.b32.xlu0 %v488, 1
        %v1600 = vpop.permute.xlu0 %1599
        %1601 = vrot.lane.b32.xlu0 %v642, 1
        %v1602 = vpop.permute.xlu0 %1601
        %v1603 = vsel %vm1394, %v1600, %v1602
        %v1604 = vsel %vm1394, %v1602, %v1600
        %1605 = vrot.lane.b32.xlu0 %v797, 1
        %v1606 = vpop.permute.xlu0 %1605
        %1607 = vrot.lane.b32.xlu0 %v952, 1
        %v1608 = vpop.permute.xlu0 %1607
        %v1609 = vsel %vm1394, %v1606, %v1608
        %v1610 = vsel %vm1394, %v1608, %v1606
        %v1611 = vmul.f32 %v1610, %v488
        %v1612 = vmul.f32 %v1609, %v642
        %v1613 = vmul.f32 %v1604, %v797
        %v1614 = vmul.f32 %v1603, %v952
        %v1615 = vsub.f32 %v1611, %v1613
        %v1616 = vsub.f32 %v1612, %v1614
        %s1617 = sld [smem:[#allocation2 + $0xc]]
        %v1618 = vstv %s1617
        %v1619 = vmul.f32 %v1618, %v1615
        %v1620 = vmul.f32 %v1618, %v1616
        %v1621 = vadd.f32 %v1597, %v1619
        %v1622 = vadd.f32 %v1598, %v1620
        %v1623 = vmul.f32 %v797, %v488
        %v1624 = vmul.f32 %v952, %v642
        %v1625 = vsub.f32 %v1623, %v1623
        %v1626 = vsub.f32 %v1624, %v1624
        %s1627 = sld [smem:[#allocation2 + $0xd]]
        %v1628 = vstv %s1627
        %v1629 = vmul.f32 %v1628, %v1625
        %v1630 = vmul.f32 %v1628, %v1626
        %v1631 = vadd.f32 %v1621, %v1629
        %v1632 = vadd.f32 %v1622, %v1630
        %1633 = vrot.lane.b32.xlu0 %v488, 127
        %v1634 = vpop.permute.xlu0 %1633
        %1635 = vrot.lane.b32.xlu0 %v642, 127
        %v1636 = vpop.permute.xlu0 %1635
        %v1637 = vsel %vm1431, %v1634, %v1636
        %v1638 = vsel %vm1431, %v1636, %v1634
        %1639 = vrot.lane.b32.xlu0 %v797, 127
        %v1640 = vpop.permute.xlu0 %1639
        %1641 = vrot.lane.b32.xlu0 %v952, 127
        %v1642 = vpop.permute.xlu0 %1641
        %v1643 = vsel %vm1431, %v1640, %v1642
        %v1644 = vsel %vm1431, %v1642, %v1640
        %v1645 = vmul.f32 %v1643, %v488
        %v1646 = vmul.f32 %v1644, %v642
        %v1647 = vmul.f32 %v1637, %v797
        %v1648 = vmul.f32 %v1638, %v952
        %v1649 = vsub.f32 %v1645, %v1647
        %v1650 = vsub.f32 %v1646, %v1648
        %s1651 = sld [smem:[#allocation2 + $0xe]]
        %v1652 = vstv %s1651
        %v1653 = vmul.f32 %v1652, %v1649
        %v1654 = vmul.f32 %v1652, %v1650
        %v1655 = vadd.f32 %v1631, %v1653
        %v1656 = vadd.f32 %v1632, %v1654
        %1657 = vrot.lane.b32.xlu0 %v488, 113
        %v1658 = vpop.permute.xlu0 %1657
        %1659 = vrot.lane.b32.xlu0 %v642, 113
        %v1660 = vpop.permute.xlu0 %1659
        %v1661 = vsel %vm1456, %v1658, %v1660
        %v1662 = vsel %vm1456, %v1660, %v1658
        %1663 = vrot.lane.b32.xlu0 %v797, 113
        %v1664 = vpop.permute.xlu0 %1663
        %1665 = vrot.lane.b32.xlu0 %v952, 113
        %v1666 = vpop.permute.xlu0 %1665
        %v1667 = vsel %vm1456, %v1664, %v1666
        %v1668 = vsel %vm1456, %v1666, %v1664
        %v1669 = vmul.f32 %v1667, %v488
        %v1670 = vmul.f32 %v1668, %v642
        %v1671 = vmul.f32 %v1661, %v797
        %v1672 = vmul.f32 %v1662, %v952
        %v1673 = vsub.f32 %v1669, %v1671
        %v1674 = vsub.f32 %v1670, %v1672
        %s1675 = sld [smem:[#allocation2 + $0xf]]
        %v1676 = vstv %s1675
        %v1677 = vmul.f32 %v1676, %v1673
        %v1678 = vmul.f32 %v1676, %v1674
        %v1679 = vadd.f32 %v1655, %v1677
        %v1680 = vadd.f32 %v1656, %v1678
        %1681 = vrot.lane.b32.xlu0 %v488, 112
        %v1682 = vpop.permute.xlu0 %1681
        %1683 = vrot.lane.b32.xlu0 %v642, 112
        %v1684 = vpop.permute.xlu0 %1683
        %v1685 = vsel %vm1481, %v1682, %v1684
        %v1686 = vsel %vm1481, %v1684, %v1682
        %1687 = vrot.lane.b32.xlu0 %v797, 112
        %v1688 = vpop.permute.xlu0 %1687
        %1689 = vrot.lane.b32.xlu0 %v952, 112
        %v1690 = vpop.permute.xlu0 %1689
        %v1691 = vsel %vm1481, %v1688, %v1690
        %v1692 = vsel %vm1481, %v1690, %v1688
        %v1693 = vmul.f32 %v1691, %v488
        %v1694 = vmul.f32 %v1692, %v642
        %v1695 = vmul.f32 %v1685, %v797
        %v1696 = vmul.f32 %v1686, %v952
        %v1697 = vsub.f32 %v1693, %v1695
        %v1698 = vsub.f32 %v1694, %v1696
        %s1699 = sld [smem:[#allocation2 + $0x10]]
        %v1700 = vstv %s1699
        %v1701 = vmul.f32 %v1700, %v1697
        %v1702 = vmul.f32 %v1700, %v1698
        %v1703 = vadd.f32 %v1679, %v1701
        %v1704 = vadd.f32 %v1680, %v1702
        %1705 = vrot.lane.b32.xlu0 %v488, 111
        %v1706 = vpop.permute.xlu0 %1705
        %1707 = vrot.lane.b32.xlu0 %v642, 111
        %v1708 = vpop.permute.xlu0 %1707
        %v1709 = vsel %vm1506, %v1706, %v1708
        %v1710 = vsel %vm1506, %v1708, %v1706
        %1711 = vrot.lane.b32.xlu0 %v797, 111
        %v1712 = vpop.permute.xlu0 %1711
        %1713 = vrot.lane.b32.xlu0 %v952, 111
        %v1714 = vpop.permute.xlu0 %1713
        %v1715 = vsel %vm1506, %v1712, %v1714
        %v1716 = vsel %vm1506, %v1714, %v1712
        %v1717 = vmul.f32 %v1715, %v488
        %v1718 = vmul.f32 %v1716, %v642
        %v1719 = vmul.f32 %v1709, %v797
        %v1720 = vmul.f32 %v1710, %v952
        %v1721 = vsub.f32 %v1717, %v1719
        %v1722 = vsub.f32 %v1718, %v1720
        %s1723 = sld [smem:[#allocation2 + $0x11]]
        %v1724 = vstv %s1723
        %v1725 = vmul.f32 %v1724, %v1721
        %v1726 = vmul.f32 %v1724, %v1722
        %v1727 = vadd.f32 %v1703, %v1725
        %v1728 = vadd.f32 %v1704, %v1726
        %1729 = vrot.lane.b32.xlu0 %v1299, 17
        %v1730 = vpop.permute.xlu0 %1729
        %1731 = vrot.lane.b32.xlu0 %v1300, 17
        %v1732 = vpop.permute.xlu0 %1731
        %v1733 = vsel %vm1319, %v1730, %v1732
        %v1734 = vsel %vm1319, %v1732, %v1730
        %1735 = vrot.lane.b32.xlu0 %v1309, 17
        %v1736 = vpop.permute.xlu0 %1735
        %1737 = vrot.lane.b32.xlu0 %v1310, 17
        %v1738 = vpop.permute.xlu0 %1737
        %v1739 = vsel %vm1319, %v1736, %v1738
        %v1740 = vsel %vm1319, %v1738, %v1736
        %v1741 = vmul.f32 %v1740, %v488
        %v1742 = vmul.f32 %v1739, %v642
        %v1743 = vmul.f32 %v1734, %v797
        %v1744 = vmul.f32 %v1733, %v952
        %v1745 = vsub.f32 %v1741, %v1743
        %v1746 = vsub.f32 %v1742, %v1744
        %s1747 = sld [smem:[#allocation2 + $0x12]]
        %v1748 = vstv %s1747
        %v1749 = vmul.f32 %v1748, %v1745
        %v1750 = vmul.f32 %v1748, %v1746
        %v1751 = vadd.f32 %v1727, %v1749
        %v1752 = vadd.f32 %v1728, %v1750
        %1753 = vrot.lane.b32.xlu0 %v1299, 16
        %v1754 = vpop.permute.xlu0 %1753
        %1755 = vrot.lane.b32.xlu0 %v1300, 16
        %v1756 = vpop.permute.xlu0 %1755
        %v1757 = vsel %vm1344, %v1754, %v1756
        %v1758 = vsel %vm1344, %v1756, %v1754
        %1759 = vrot.lane.b32.xlu0 %v1309, 16
        %v1760 = vpop.permute.xlu0 %1759
        %1761 = vrot.lane.b32.xlu0 %v1310, 16
        %v1762 = vpop.permute.xlu0 %1761
        %v1763 = vsel %vm1344, %v1760, %v1762
        %v1764 = vsel %vm1344, %v1762, %v1760
        %v1765 = vmul.f32 %v1764, %v488
        %v1766 = vmul.f32 %v1763, %v642
        %v1767 = vmul.f32 %v1758, %v797
        %v1768 = vmul.f32 %v1757, %v952
        %v1769 = vsub.f32 %v1765, %v1767
        %v1770 = vsub.f32 %v1766, %v1768
        %s1771 = sld [smem:[#allocation2 + $0x13]]
        %v1772 = vstv %s1771
        %v1773 = vmul.f32 %v1772, %v1769
        %v1774 = vmul.f32 %v1772, %v1770
        %v1775 = vadd.f32 %v1751, %v1773
        %v1776 = vadd.f32 %v1752, %v1774
        %1777 = vrot.lane.b32.xlu0 %v1299, 15
        %v1778 = vpop.permute.xlu0 %1777
        %1779 = vrot.lane.b32.xlu0 %v1300, 15
        %v1780 = vpop.permute.xlu0 %1779
        %v1781 = vsel %vm1369, %v1778, %v1780
        %v1782 = vsel %vm1369, %v1780, %v1778
        %1783 = vrot.lane.b32.xlu0 %v1309, 15
        %v1784 = vpop.permute.xlu0 %1783
        %1785 = vrot.lane.b32.xlu0 %v1310, 15
        %v1786 = vpop.permute.xlu0 %1785
        %v1787 = vsel %vm1369, %v1784, %v1786
        %v1788 = vsel %vm1369, %v1786, %v1784
        %v1789 = vmul.f32 %v1788, %v488
        %v1790 = vmul.f32 %v1787, %v642
        %v1791 = vmul.f32 %v1782, %v797
        %v1792 = vmul.f32 %v1781, %v952
        %v1793 = vsub.f32 %v1789, %v1791
        %v1794 = vsub.f32 %v1790, %v1792
        %s1795 = sld [smem:[#allocation2 + $0x14]]
        %v1796 = vstv %s1795
        %v1797 = vmul.f32 %v1796, %v1793
        %v1798 = vmul.f32 %v1796, %v1794
        %v1799 = vadd.f32 %v1775, %v1797
        %v1800 = vadd.f32 %v1776, %v1798
        %1801 = vrot.lane.b32.xlu0 %v1299, 1
        %v1802 = vpop.permute.xlu0 %1801
        %1803 = vrot.lane.b32.xlu0 %v1300, 1
        %v1804 = vpop.permute.xlu0 %1803
        %v1805 = vsel %vm1394, %v1802, %v1804
        %v1806 = vsel %vm1394, %v1804, %v1802
        %1807 = vrot.lane.b32.xlu0 %v1309, 1
        %v1808 = vpop.permute.xlu0 %1807
        %1809 = vrot.lane.b32.xlu0 %v1310, 1
        %v1810 = vpop.permute.xlu0 %1809
        %v1811 = vsel %vm1394, %v1808, %v1810
        %v1812 = vsel %vm1394, %v1810, %v1808
        %v1813 = vmul.f32 %v1812, %v488
        %v1814 = vmul.f32 %v1811, %v642
        %v1815 = vmul.f32 %v1806, %v797
        %v1816 = vmul.f32 %v1805, %v952
        %v1817 = vsub.f32 %v1813, %v1815
        %v1818 = vsub.f32 %v1814, %v1816
        %s1819 = sld [smem:[#allocation2 + $0x15]]
        %v1820 = vstv %s1819
        %v1821 = vmul.f32 %v1820, %v1817
        %v1822 = vmul.f32 %v1820, %v1818
        %v1823 = vadd.f32 %v1799, %v1821
        %v1824 = vadd.f32 %v1800, %v1822
        %v1825 = vmul.f32 %v1309, %v488
        %v1826 = vmul.f32 %v1310, %v642
        %v1827 = vmul.f32 %v1299, %v797
        %v1828 = vmul.f32 %v1300, %v952
        %v1829 = vsub.f32 %v1825, %v1827
        %v1830 = vsub.f32 %v1826, %v1828
        %s1831 = sld [smem:[#allocation2 + $0x16]]
        %v1832 = vstv %s1831
        %v1833 = vmul.f32 %v1832, %v1829
        %v1834 = vmul.f32 %v1832, %v1830
        %v1835 = vadd.f32 %v1823, %v1833
        %v1836 = vadd.f32 %v1824, %v1834
        %1837 = vrot.lane.b32.xlu0 %v1299, 127
        %v1838 = vpop.permute.xlu0 %1837
        %1839 = vrot.lane.b32.xlu0 %v1300, 127
        %v1840 = vpop.permute.xlu0 %1839
        %v1841 = vsel %vm1431, %v1838, %v1840
        %v1842 = vsel %vm1431, %v1840, %v1838
        %1843 = vrot.lane.b32.xlu0 %v1309, 127
        %v1844 = vpop.permute.xlu0 %1843
        %1845 = vrot.lane.b32.xlu0 %v1310, 127
        %v1846 = vpop.permute.xlu0 %1845
        %v1847 = vsel %vm1431, %v1844, %v1846
        %v1848 = vsel %vm1431, %v1846, %v1844
        %v1849 = vmul.f32 %v1847, %v488
        %v1850 = vmul.f32 %v1848, %v642
        %v1851 = vmul.f32 %v1841, %v797
        %v1852 = vmul.f32 %v1842, %v952
        %v1853 = vsub.f32 %v1849, %v1851
        %v1854 = vsub.f32 %v1850, %v1852
        %s1855 = sld [smem:[#allocation2 + $0x17]]
        %v1856 = vstv %s1855
        %v1857 = vmul.f32 %v1856, %v1853
        %v1858 = vmul.f32 %v1856, %v1854
        %v1859 = vadd.f32 %v1835, %v1857
        %v1860 = vadd.f32 %v1836, %v1858
        %1861 = vrot.lane.b32.xlu0 %v1299, 113
        %v1862 = vpop.permute.xlu0 %1861
        %1863 = vrot.lane.b32.xlu0 %v1300, 113
        %v1864 = vpop.permute.xlu0 %1863
        %v1865 = vsel %vm1456, %v1862, %v1864
        %v1866 = vsel %vm1456, %v1864, %v1862
        %1867 = vrot.lane.b32.xlu0 %v1309, 113
        %v1868 = vpop.permute.xlu0 %1867
        %1869 = vrot.lane.b32.xlu0 %v1310, 113
        %v1870 = vpop.permute.xlu0 %1869
        %v1871 = vsel %vm1456, %v1868, %v1870
        %v1872 = vsel %vm1456, %v1870, %v1868
        %v1873 = vmul.f32 %v1871, %v488
        %v1874 = vmul.f32 %v1872, %v642
        %v1875 = vmul.f32 %v1865, %v797
        %v1876 = vmul.f32 %v1866, %v952
        %v1877 = vsub.f32 %v1873, %v1875
        %v1878 = vsub.f32 %v1874, %v1876
        %s1879 = sld [smem:[#allocation2 + $0x18]]
        %v1880 = vstv %s1879
        %v1881 = vmul.f32 %v1880, %v1877
        %v1882 = vmul.f32 %v1880, %v1878
        %v1883 = vadd.f32 %v1859, %v1881
        %v1884 = vadd.f32 %v1860, %v1882
        %1885 = vrot.lane.b32.xlu0 %v1299, 112
        %v1886 = vpop.permute.xlu0 %1885
        %1887 = vrot.lane.b32.xlu0 %v1300, 112
        %v1888 = vpop.permute.xlu0 %1887
        %v1889 = vsel %vm1481, %v1886, %v1888
        %v1890 = vsel %vm1481, %v1888, %v1886
        %1891 = vrot.lane.b32.xlu0 %v1309, 112
        %v1892 = vpop.permute.xlu0 %1891
        %1893 = vrot.lane.b32.xlu0 %v1310, 112
        %v1894 = vpop.permute.xlu0 %1893
        %v1895 = vsel %vm1481, %v1892, %v1894
        %v1896 = vsel %vm1481, %v1894, %v1892
        %v1897 = vmul.f32 %v1895, %v488
        %v1898 = vmul.f32 %v1896, %v642
        %v1899 = vmul.f32 %v1889, %v797
        %v1900 = vmul.f32 %v1890, %v952
        %v1901 = vsub.f32 %v1897, %v1899
        %v1902 = vsub.f32 %v1898, %v1900
        %s1903 = sld [smem:[#allocation2 + $0x19]]
        %v1904 = vstv %s1903
        %v1905 = vmul.f32 %v1904, %v1901
        %v1906 = vmul.f32 %v1904, %v1902
        %v1907 = vadd.f32 %v1883, %v1905
        %v1908 = vadd.f32 %v1884, %v1906
        %1909 = vrot.lane.b32.xlu0 %v1299, 111
        %v1910 = vpop.permute.xlu0 %1909
        %1911 = vrot.lane.b32.xlu0 %v1300, 111
        %v1912 = vpop.permute.xlu0 %1911
        %v1913 = vsel %vm1506, %v1910, %v1912
        %v1914 = vsel %vm1506, %v1912, %v1910
        %1915 = vrot.lane.b32.xlu0 %v1309, 111
        %v1916 = vpop.permute.xlu0 %1915
        %1917 = vrot.lane.b32.xlu0 %v1310, 111
        %v1918 = vpop.permute.xlu0 %1917
        %v1919 = vsel %vm1506, %v1916, %v1918
        %v1920 = vsel %vm1506, %v1918, %v1916
        %v1921 = vmul.f32 %v1919, %v488
        %v1922 = vmul.f32 %v1920, %v642
        %v1923 = vmul.f32 %v1913, %v797
        %v1924 = vmul.f32 %v1914, %v952
        %v1925 = vsub.f32 %v1921, %v1923
        %v1926 = vsub.f32 %v1922, %v1924
        %s1927 = sld [smem:[#allocation2 + $0x1a]]
        %v1928 = vstv %s1927
        %v1929 = vmul.f32 %v1928, %v1925
        %v1930 = vmul.f32 %v1928, %v1926
        %v1931 = vadd.f32 %v1907, %v1929
        %v1932 = vadd.f32 %v1908, %v1930
        %v1933 = vmul.f32 %v1931, %v1311
        %v1934 = vmul.f32 %v1932, %v1312
        %1935 = vst [vmem:[%s332] sm:$0xff] %v1933
        %1936 = vst [vmem:[%s332 + $0x8] sm:$0xff] %v1934
        %s1937 = sand.u32 %s152, 1
        %s1938 = scalar_lea.sflag [#allocation4], %s1937
        %s1939 = sand.u32 %s152, 1
        %s1940 = smul.addr %s1939, 16
        %s1941 = scalar_lea.vmem [#allocation10], %s1940
        // Predicated region
        $region53: #{tpu_custom_call.1} parent=35 // pred_check
          %p1942 = pneg %p162
        $region54: #{tpu_custom_call.1} parent=35 // pred_check_branch
          %1944 = sbr.rel (%p1942) target = $region56
        $region55: #{tpu_custom_call.1} parent=35 // pred_region
          %1946 = vsyncadd %s1938, 0
          %s1947 = smul.addr %s30, 2
          %s1948 = smul.addr %s29, 4
          %s1949 = sadd.s32 %s1947, %s1948
          %s1950 = smul.addr %s1949, 8
          %s1951 = scalar_lea.hbm %s4, %s1950
          %s1953 = sshll.u32 %s1941, 4
          %s1954 = int_to_ptr.vmem [resolvable:$true] %s1953
          %s1955 = sshll.u32 %s1951, 4
          %s1956 = int_to_ptr.hbm [resolvable:$true] %s1955
          %1958 = dma.vmem_to_hbm [thread:$0]  %s1954, 256, %s1956, %s1938
        $region56: #{tpu_custom_call.1} parent=35 // pred_fallthru
          _
      $region36: #{tpu_custom_call.1} parent=5 // pred_fallthru
        _
      %p1959 = scmp.le.s32.totalorder 2, %s20
      // Predicated region
      $region57: #{tpu_custom_call.1} parent=5 // pred_check
        %p1960 = pneg %p1959
      $region58: #{tpu_custom_call.1} parent=5 // pred_check_branch
        %1962 = sbr.rel (%p1960) target = $region60
      $region59: #{tpu_custom_call.1} parent=5 // pred_region
        %s1963 = ssub.s32 %s20, 2
        // Predicated region
        $region61: #{tpu_custom_call.1} parent=59 // pred_check
          %p1964 = pneg %p168
        $region62: #{tpu_custom_call.1} parent=59 // pred_check_branch
          %1966 = sbr.rel (%p1964) target = $region64
        $region63: #{tpu_custom_call.1} parent=59 // pred_region
          %s1967 = sand.u32 %s153, 1
          %s1968 = scalar_lea.sflag [#allocation4], %s1967
          %s1969 = sand.u32 %s153, 1
          %s1970 = smul.addr %s1969, 16
          %s1971 = scalar_lea.vmem [#allocation10], %s1970
          %1973 = dma.done %s1968, 256
        $region64: #{tpu_custom_call.1} parent=59 // pred_fallthru
          _
      $region60: #{tpu_custom_call.1} parent=5 // pred_fallthru
        _
    $region6: #{tpu_custom_call.1} parent=1 // loop_footer
      %s24 = sadd.s32 1, %s20
    $region7: #{tpu_custom_call.1} parent=1 // loop_footer_branch
      %19 = sbr.rel target = $region3
    $region8: #{tpu_custom_call.1} parent=1 // loop_exit
      _
    %1974 = vsyncpa [#allocation3], 1
    %s1975 = scalar_lea.sflag [#allocation3], 1
    %1976 = vsyncpa %s1975, 1
    %1977 = vsyncpa [#allocation8], 1
    %s1978 = scalar_lea.sflag [#allocation8], 1
    %1979 = vsyncpa %s1978, 1
    %1980 = vsyncpa [#allocation4], 1
    %s1981 = scalar_lea.sflag [#allocation4], 1
    %1982 = vsyncpa %s1981, 1
    %1983 = vsyncpa [#allocation5], 1
    %s1984 = scalar_lea.sflag [#allocation5], 1
    %1985 = vsyncpa %s1984, 1

</llo_original>
